<compile_context>
chip_gen: v6e
topology: v6e:2x2x1
jax: 0.10.0
libtpu: 0.0.40
codegen_flags: <defaults>
</compile_context>

<pallas_src>
import math
from functools import partial

import jax
import jax.numpy as jnp
import numpy as np
from jax.experimental import pallas as pl
from jax.experimental.pallas import tpu as pltpu

MAX_SEQUENCE_LENGTH = 102


# ------------------------------ fused kernel --------------------------------

def _fused_mha_kernel(q_ref, k_ref, v_ref,
                      wq_ref, wk_ref, wv_ref, wo_ref,
                      cos_ref, sin_ref,
                      o_ref, *, num_heads, head_dim, scale):
    """One batch element per grid step; everything runs on VMEM-resident data.

    q_ref/k_ref/v_ref : [N, hidden]   rows of this batch element (flat layout)
    w*_ref            : [hidden, hidden]  PyTorch Linear weight, applied as x @ W^T
    cos_ref/sin_ref   : [N, hidden]   rope maps pre-broadcast to the flat layout
                        (sin already carries the rotate-half +/- sign per lane)
    o_ref             : [N, hidden]   lane-dense final output tile
    """

    def proj(x_ref, w_ref):
        # x @ W^T with W stored PyTorch-style [out_features, in_features]
        return jax.lax.dot_general(
            x_ref[...], w_ref[...],
            dimension_numbers=(((1,), (1,)), ((), ())),
            preferred_element_type=jnp.float32)

    q = proj(q_ref, wq_ref)          # [Nq, hidden]
    k = proj(k_ref, wk_ref)          # [Nk, hidden]
    v = proj(v_ref, wv_ref)          # [Nk, hidden]

    cos = cos_ref[...]
    sin = sin_ref[...]               # rotate-half sign pre-folded by the wrapper

    # Even-lane mask built once, reused for both rope applications.
    lane = jax.lax.broadcasted_iota(jnp.int32, q.shape, 1)
    even_lane = (lane & 1) == 0

    def rope(x):
        # pairswap: out[2i] = x[2i+1], out[2i+1] = x[2i].  head_dim is even so
        # pairs never cross head boundaries; the flat layout is exact.  The
        # -x[2i+1] sign of the reference lives in the precomputed sin map.
        shl = jnp.concatenate([x[:, 1:], x[:, :1]], axis=1)     # x[:, j+1]
        shr = jnp.concatenate([x[:, -1:], x[:, :-1]], axis=1)   # x[:, j-1]
        return x * cos + jnp.where(even_lane, shl, shr) * sin

    q = rope(q) * scale              # fold 1/sqrt(d) into q (Nq*hidden mults)
    k = rope(k)

    # --- attention, all heads unrolled in-kernel (data already in VMEM) -----
    head_outs = []
    for h in range(num_heads):
        c0 = h * head_dim
        qh = q[:, c0:c0 + head_dim]
        kh = k[:, c0:c0 + head_dim]
        vh = v[:, c0:c0 + head_dim]
        s = jax.lax.dot_general(     # [Nq, Nk]
            qh, kh, dimension_numbers=(((1,), (1,)), ((), ())),
            preferred_element_type=jnp.float32)
        s_max = jnp.max(s, axis=-1, keepdims=True)
        p = jnp.exp(s - s_max)
        # Exact reciprocal keeps 1e-5 parity; normalization happens on the
        # [Nq, head_dim] PV result instead of the [Nq, Nk] probability tile.
        inv_l = 1.0 / jnp.sum(p, axis=-1, keepdims=True)
        head_outs.append(
            jnp.dot(p, vh, preferred_element_type=jnp.float32) * inv_l)

    merged = jnp.concatenate(head_outs, axis=1)  # [Nq, hidden]  (b n (h d) merge)

    # output projection + single lane-dense store
    o_ref[...] = jax.lax.dot_general(
        merged, wo_ref[...],
        dimension_numbers=(((1,), (1,)), ((), ())),
        preferred_element_type=jnp.float32).astype(o_ref.dtype)


# ------------------------------- JAX glue -----------------------------------

def create_rotary_embeddings(seq_length, head_dim):
    """Replicates MultiHeadAttention._create_rotary_embeddings."""
    position = jnp.arange(seq_length, dtype=jnp.float32)
    dim = head_dim // 2
    inv_freq = 1.0 / (10000.0 ** (jnp.arange(0, dim, 2, dtype=jnp.float32) / dim))
    sinusoid_inp = jnp.einsum('i,j->ij', position, inv_freq)
    return jnp.stack([jnp.sin(sinusoid_inp), jnp.cos(sinusoid_inp)], axis=0)


def _rope_maps(rope_cache, num_heads, head_dim, seq_q, seq_k):
    """Reproduce the module's (quirky) cos/sin selection and pre-broadcast it to
    flat [seq, hidden] maps matching the kernel's [n, h*D + d] layout.  The
    rotate-half sign (-1 on even lanes) is folded into the sin map."""
    sin = rope_cache[:, :seq_q]      # full [sin;cos] stack sliced, as in the module
    cos = rope_cache[:, :seq_k]
    # Broadcast exactly as x[B,H,N,D] * cos[2,N,C] would (requires num_heads == 2,
    # identical to the PyTorch module's implicit constraint).
    cos_hnd = jnp.broadcast_to(cos, (num_heads, seq_q, head_dim))
    sin_hnd = jnp.broadcast_to(sin, (num_heads, seq_q, head_dim))
    hidden = num_heads * head_dim
    cos_map = jnp.transpose(cos_hnd, (1, 0, 2)).reshape(seq_q, hidden)
    sin_map = jnp.transpose(sin_hnd, (1, 0, 2)).reshape(seq_q, hidden)
    # Fold the rotate-half sign:  out[2i] uses -sin, out[2i+1] uses +sin.
    sign = jnp.where(jnp.arange(hidden) % 2 == 0, -1.0, 1.0).astype(jnp.float32)
    return cos_map, sin_map * sign


def multi_head_attention_forward(params, query, key, value, num_heads):
    B, Nq, hidden = query.shape
    Nk = key.shape[1]
    head_dim = hidden // num_heads
    assert hidden % num_heads == 0 and head_dim % 2 == 0
    # The reference's rope broadcast requires seq_q == seq_k; the block's
    # second-to-last dim must be 8-aligned when B > 1.
    assert Nq == Nk and (B == 1 or Nq % 8 == 0)

    scale = 1.0 / math.sqrt(head_dim)
    cos_map, sin_map = _rope_maps(params['rotary_emb_cache'],
                                  num_heads, head_dim, Nq, Nk)

    q2d = query.reshape(B * Nq, hidden)
    k2d = key.reshape(B * Nk, hidden)
    v2d = value.reshape(B * Nk, hidden)

    flops = (4 * 2 * B * Nq * hidden * hidden                       # 4 projections
             + 2 * 2 * B * num_heads * Nq * Nk * head_dim           # QK^T and PV
             + 8 * B * Nq * hidden)                                 # RoPE elementwise
    bytes_accessed = 4 * (3 * B * Nq * hidden + 4 * hidden * hidden
                          + 2 * Nq * hidden + B * Nq * hidden)

    out2d = pl.pallas_call(
        partial(_fused_mha_kernel,
                num_heads=num_heads, head_dim=head_dim, scale=scale),
        out_shape=jax.ShapeDtypeStruct((B * Nq, hidden), jnp.float32),
        grid=(B,),
        in_specs=[
            pl.BlockSpec((Nq, hidden), lambda b: (b, 0)),      # query rows of batch b
            pl.BlockSpec((Nk, hidden), lambda b: (b, 0)),      # key rows
            pl.BlockSpec((Nk, hidden), lambda b: (b, 0)),      # value rows
            pl.BlockSpec((hidden, hidden), lambda b: (0, 0)),  # wq (VMEM-resident)
            pl.BlockSpec((hidden, hidden), lambda b: (0, 0)),  # wk
            pl.BlockSpec((hidden, hidden), lambda b: (0, 0)),  # wv
            pl.BlockSpec((hidden, hidden), lambda b: (0, 0)),  # wo
            pl.BlockSpec((Nq, hidden), lambda b: (0, 0)),      # cos map
            pl.BlockSpec((Nq, hidden), lambda b: (0, 0)),      # signed sin map
        ],
        out_specs=pl.BlockSpec((Nq, hidden), lambda b: (b, 0)),
        compiler_params=pltpu.CompilerParams(
            dimension_semantics=("parallel",)),
        cost_estimate=pl.CostEstimate(
            flops=flops,
            transcendentals=B * num_heads * Nq * Nk,
            bytes_accessed=bytes_accessed),
    )(q2d, k2d, v2d,
      params['wq'], params['wk'], params['wv'], params['wo'],
      cos_map, sin_map)

    return out2d.reshape(B, Nq, hidden)


# ----------------------- pure-JAX reference (no Pallas) ----------------------

def apply_rotary_embeddings(x, cos, sin):
    """Exact JAX port of the torch.jit.script apply_rotary_embeddings."""
    x2 = jnp.stack([-x[..., 1::2], x[..., ::2]], axis=-1).reshape(x.shape)
    return x * cos + x2 * sin


def reference_forward(params, query, key, value, num_heads):
    hidden_dim = query.shape[-1]
    head_dim = hidden_dim // num_heads
    B, Nq, _ = query.shape
    Nk = key.shape[1]

    q = query @ params['wq'].T
    k = key @ params['wk'].T
    v = value @ params['wv'].T
    q = q.reshape(B, Nq, num_heads, head_dim).transpose(0, 2, 1, 3)
    k = k.reshape(B, Nk, num_heads, head_dim).transpose(0, 2, 1, 3)
    v = v.reshape(B, Nk, num_heads, head_dim).transpose(0, 2, 1, 3)

    rope = params['rotary_emb_cache']
    sin = rope[:, :Nq]
    cos = rope[:, :Nk]
    q = apply_rotary_embeddings(q, cos, sin)
    k = apply_rotary_embeddings(k, cos, sin)

    scale = 1.0 / math.sqrt(head_dim)
    scores = jnp.einsum('bhqd,bhkd->bhqk', q, k) * scale
    w = jax.nn.softmax(scores, axis=-1)
    attn = jnp.einsum('bhqk,bhkd->bhqd', w, v)
    out = attn.transpose(0, 2, 1, 3).reshape(B, Nq, hidden_dim)
    return out @ params['wo'].T


# --------------------------------- main --------------------------------------

if __name__ == "__main__":
    # Small shapes consistent with the module's forward semantics:
    # num_heads must be 2 and head_dim must be 4 for the module's rope
    # broadcast to be valid, hence hidden_dim = 8; seq <= MAX_SEQUENCE_LENGTH.
    B, N, hidden_dim, num_heads = 2, 64, 8, 2
    head_dim = hidden_dim // num_heads  # = 4

    root = jax.random.PRNGKey(0)
    kq, kk, kv, kwq, kwk, kwv, kwo = jax.random.split(root, 7)
    bound = 1.0 / math.sqrt(hidden_dim)  # PyTorch Linear default init range

    params = {
        'wq': jax.random.uniform(kwq, (hidden_dim, hidden_dim), jnp.float32, -bound, bound),
        'wk': jax.random.uniform(kwk, (hidden_dim, hidden_dim), jnp.float32, -bound, bound),
        'wv': jax.random.uniform(kwv, (hidden_dim, hidden_dim), jnp.float32, -bound, bound),
        'wo': jax.random.uniform(kwo, (hidden_dim, hidden_dim), jnp.float32, -bound, bound),
        'rotary_emb_cache': create_rotary_embeddings(MAX_SEQUENCE_LENGTH, head_dim),
    }

    query = jax.random.normal(kq, (B, N, hidden_dim), jnp.float32)
    key_t = jax.random.normal(kk, (B, N, hidden_dim), jnp.float32)
    value = jax.random.normal(kv, (B, N, hidden_dim), jnp.float32)

    out = multi_head_attention_forward(params, query, key_t, value, num_heads)
    out = jax.block_until_ready(out)

    ref = reference_forward(params, query, key_t, value, num_heads)
    np.testing.assert_allclose(np.asarray(out), np.asarray(ref), rtol=1e-5, atol=1e-5)

    print("KERNEL_OK")
</pallas_src>

<mosaic_0001>
module attributes {stable_mosaic.version = 11 : i64} {
  func.func @_fused_mha_kernel(%arg0: i32, %arg1: memref<64x8xf32, #tpu.memory_space<vmem>>, %arg2: memref<64x8xf32, #tpu.memory_space<vmem>>, %arg3: memref<64x8xf32, #tpu.memory_space<vmem>>, %arg4: memref<8x8xf32, #tpu.memory_space<vmem>>, %arg5: memref<8x8xf32, #tpu.memory_space<vmem>>, %arg6: memref<8x8xf32, #tpu.memory_space<vmem>>, %arg7: memref<8x8xf32, #tpu.memory_space<vmem>>, %arg8: memref<64x8xf32, #tpu.memory_space<vmem>>, %arg9: memref<64x8xf32, #tpu.memory_space<vmem>>, %arg10: memref<64x8xf32, #tpu.memory_space<vmem>>) attributes {dimension_semantics = [#tpu.dimension_semantics<parallel>], iteration_bounds = array<i64: 2>, scalar_prefetch = 0 : i64, scratch_operands = 0 : i64, tpu.core_type = #tpu.core_type<tc>, window_params = [{transform_indices = @transform_0, window_bounds = array<i64: 64, 8>}, {transform_indices = @transform_1, window_bounds = array<i64: 64, 8>}, {transform_indices = @transform_2, window_bounds = array<i64: 64, 8>}, {pipeline_mode = #tpu.pipeline_mode<synchronous>, transform_indices = @transform_3, window_bounds = array<i64: 8, 8>}, {pipeline_mode = #tpu.pipeline_mode<synchronous>, transform_indices = @transform_4, window_bounds = array<i64: 8, 8>}, {pipeline_mode = #tpu.pipeline_mode<synchronous>, transform_indices = @transform_5, window_bounds = array<i64: 8, 8>}, {pipeline_mode = #tpu.pipeline_mode<synchronous>, transform_indices = @transform_6, window_bounds = array<i64: 8, 8>}, {pipeline_mode = #tpu.pipeline_mode<synchronous>, transform_indices = @transform_7, window_bounds = array<i64: 64, 8>}, {pipeline_mode = #tpu.pipeline_mode<synchronous>, transform_indices = @transform_8, window_bounds = array<i64: 64, 8>}, {transform_indices = @transform_9, window_bounds = array<i64: 64, 8>}]} {
    %c0 = arith.constant 0 : index
    %c0_0 = arith.constant 0 : index
    %0 = vector.load %arg1[%c0, %c0_0] : memref<64x8xf32, #tpu.memory_space<vmem>>, vector<64x8xf32>
    %c0_1 = arith.constant 0 : index
    %c0_2 = arith.constant 0 : index
    %1 = vector.load %arg4[%c0_1, %c0_2] : memref<8x8xf32, #tpu.memory_space<vmem>>, vector<8x8xf32>
    %cst = arith.constant dense<0.000000e+00> : vector<64x8xf32>
    %2 = tpu.matmul %0, %1, %cst {dimension_numbers = #tpu.dot_dimension_numbers<[1], [1], [0], [0], [0, 0, 1, 0], [], []>} : vector<64x8xf32>, vector<8x8xf32>, vector<64x8xf32> -> vector<64x8xf32>
    %c0_3 = arith.constant 0 : index
    %c0_4 = arith.constant 0 : index
    %3 = vector.load %arg2[%c0_3, %c0_4] : memref<64x8xf32, #tpu.memory_space<vmem>>, vector<64x8xf32>
    %c0_5 = arith.constant 0 : index
    %c0_6 = arith.constant 0 : index
    %4 = vector.load %arg5[%c0_5, %c0_6] : memref<8x8xf32, #tpu.memory_space<vmem>>, vector<8x8xf32>
    %cst_7 = arith.constant dense<0.000000e+00> : vector<64x8xf32>
    %5 = tpu.matmul %3, %4, %cst_7 {dimension_numbers = #tpu.dot_dimension_numbers<[1], [1], [0], [0], [0, 0, 1, 0], [], []>} : vector<64x8xf32>, vector<8x8xf32>, vector<64x8xf32> -> vector<64x8xf32>
    %c0_8 = arith.constant 0 : index
    %c0_9 = arith.constant 0 : index
    %6 = vector.load %arg3[%c0_8, %c0_9] : memref<64x8xf32, #tpu.memory_space<vmem>>, vector<64x8xf32>
    %c0_10 = arith.constant 0 : index
    %c0_11 = arith.constant 0 : index
    %7 = vector.load %arg6[%c0_10, %c0_11] : memref<8x8xf32, #tpu.memory_space<vmem>>, vector<8x8xf32>
    %cst_12 = arith.constant dense<0.000000e+00> : vector<64x8xf32>
    %8 = tpu.matmul %6, %7, %cst_12 {dimension_numbers = #tpu.dot_dimension_numbers<[1], [1], [0], [0], [0, 0, 1, 0], [], []>} : vector<64x8xf32>, vector<8x8xf32>, vector<64x8xf32> -> vector<64x8xf32>
    %c0_13 = arith.constant 0 : index
    %c0_14 = arith.constant 0 : index
    %9 = vector.load %arg8[%c0_13, %c0_14] : memref<64x8xf32, #tpu.memory_space<vmem>>, vector<64x8xf32>
    %c0_15 = arith.constant 0 : index
    %c0_16 = arith.constant 0 : index
    %10 = vector.load %arg9[%c0_15, %c0_16] : memref<64x8xf32, #tpu.memory_space<vmem>>, vector<64x8xf32>
    %11 = tpu.iota {dimensions = array<i32: 1>} : vector<64x8xi32>
    %c1_i32 = arith.constant 1 : i32
    %12 = vector.broadcast %c1_i32 : i32 to vector<64x8xi32>
    %13 = arith.andi %11, %12 : vector<64x8xi32>
    %c0_i32 = arith.constant 0 : i32
    %14 = vector.broadcast %c0_i32 : i32 to vector<64x8xi32>
    %15 = arith.cmpi eq, %13, %14 : vector<64x8xi32>
    %16 = vector.extract_strided_slice %2 {offsets = [0, 1], sizes = [64, 7], strides = [1, 1]} : vector<64x8xf32> to vector<64x7xf32>
    %17 = vector.extract_strided_slice %2 {offsets = [0, 0], sizes = [64, 1], strides = [1, 1]} : vector<64x8xf32> to vector<64x1xf32>
    %18 = tpu.concatenate %16, %17 in 1 : vector<64x7xf32>, vector<64x1xf32> -> vector<64x8xf32>
    %19 = vector.extract_strided_slice %2 {offsets = [0, 7], sizes = [64, 1], strides = [1, 1]} : vector<64x8xf32> to vector<64x1xf32>
    %20 = vector.extract_strided_slice %2 {offsets = [0, 0], sizes = [64, 7], strides = [1, 1]} : vector<64x8xf32> to vector<64x7xf32>
    %21 = tpu.concatenate %19, %20 in 1 : vector<64x1xf32>, vector<64x7xf32> -> vector<64x8xf32>
    %22 = arith.mulf %2, %9 : vector<64x8xf32>
    %23 = arith.select %15, %18, %21 : vector<64x8xi1>, vector<64x8xf32>
    %24 = arith.mulf %23, %10 : vector<64x8xf32>
    %25 = arith.addf %22, %24 : vector<64x8xf32>
    %cst_17 = arith.constant 5.000000e-01 : f32
    %26 = vector.broadcast %cst_17 : f32 to vector<64x8xf32>
    %27 = arith.mulf %25, %26 : vector<64x8xf32>
    %28 = vector.extract_strided_slice %5 {offsets = [0, 1], sizes = [64, 7], strides = [1, 1]} : vector<64x8xf32> to vector<64x7xf32>
    %29 = vector.extract_strided_slice %5 {offsets = [0, 0], sizes = [64, 1], strides = [1, 1]} : vector<64x8xf32> to vector<64x1xf32>
    %30 = tpu.concatenate %28, %29 in 1 : vector<64x7xf32>, vector<64x1xf32> -> vector<64x8xf32>
    %31 = vector.extract_strided_slice %5 {offsets = [0, 7], sizes = [64, 1], strides = [1, 1]} : vector<64x8xf32> to vector<64x1xf32>
    %32 = vector.extract_strided_slice %5 {offsets = [0, 0], sizes = [64, 7], strides = [1, 1]} : vector<64x8xf32> to vector<64x7xf32>
    %33 = tpu.concatenate %31, %32 in 1 : vector<64x1xf32>, vector<64x7xf32> -> vector<64x8xf32>
    %34 = arith.mulf %5, %9 : vector<64x8xf32>
    %35 = arith.select %15, %30, %33 : vector<64x8xi1>, vector<64x8xf32>
    %36 = arith.mulf %35, %10 : vector<64x8xf32>
    %37 = arith.addf %34, %36 : vector<64x8xf32>
    %38 = vector.extract_strided_slice %27 {offsets = [0, 0], sizes = [64, 4], strides = [1, 1]} : vector<64x8xf32> to vector<64x4xf32>
    %39 = vector.extract_strided_slice %37 {offsets = [0, 0], sizes = [64, 4], strides = [1, 1]} : vector<64x8xf32> to vector<64x4xf32>
    %40 = vector.extract_strided_slice %8 {offsets = [0, 0], sizes = [64, 4], strides = [1, 1]} : vector<64x8xf32> to vector<64x4xf32>
    %cst_18 = arith.constant dense<0.000000e+00> : vector<64x64xf32>
    %41 = tpu.matmul %38, %39, %cst_18 {dimension_numbers = #tpu.dot_dimension_numbers<[1], [1], [0], [0], [0, 0, 1, 0], [], []>} : vector<64x4xf32>, vector<64x4xf32>, vector<64x64xf32> -> vector<64x64xf32>
    %cst_19 = arith.constant dense<0xFF800000> : vector<64xf32>
    %42 = vector.multi_reduction <maximumf>, %41, %cst_19 [1] : vector<64x64xf32> to vector<64xf32>
    %43 = vector.shape_cast %42 : vector<64xf32> to vector<64x1xf32>
    %44 = vector.broadcast %43 : vector<64x1xf32> to vector<64x64xf32>
    %45 = arith.subf %41, %44 : vector<64x64xf32>
    %46 = math.exp %45 : vector<64x64xf32>
    %cst_20 = arith.constant dense<0.000000e+00> : vector<64xf32>
    %47 = vector.multi_reduction <add>, %46, %cst_20 [1] : vector<64x64xf32> to vector<64xf32>
    %48 = vector.shape_cast %47 : vector<64xf32> to vector<64x1xf32>
    %cst_21 = arith.constant 1.000000e+00 : f32
    %49 = vector.broadcast %cst_21 : f32 to vector<64x1xf32>
    %50 = arith.divf %49, %48 : vector<64x1xf32>
    %cst_22 = arith.constant dense<0.000000e+00> : vector<64x4xf32>
    %51 = tpu.matmul %46, %40, %cst_22 {dimension_numbers = #tpu.dot_dimension_numbers<[1], [0], [0], [1], [0, 0, 1, 1], [], []>} : vector<64x64xf32>, vector<64x4xf32>, vector<64x4xf32> -> vector<64x4xf32>
    %52 = vector.broadcast %50 : vector<64x1xf32> to vector<64x4xf32>
    %53 = arith.mulf %51, %52 : vector<64x4xf32>
    %54 = vector.extract_strided_slice %27 {offsets = [0, 4], sizes = [64, 4], strides = [1, 1]} : vector<64x8xf32> to vector<64x4xf32>
    %55 = vector.extract_strided_slice %37 {offsets = [0, 4], sizes = [64, 4], strides = [1, 1]} : vector<64x8xf32> to vector<64x4xf32>
    %56 = vector.extract_strided_slice %8 {offsets = [0, 4], sizes = [64, 4], strides = [1, 1]} : vector<64x8xf32> to vector<64x4xf32>
    %cst_23 = arith.constant dense<0.000000e+00> : vector<64x64xf32>
    %57 = tpu.matmul %54, %55, %cst_23 {dimension_numbers = #tpu.dot_dimension_numbers<[1], [1], [0], [0], [0, 0, 1, 0], [], []>} : vector<64x4xf32>, vector<64x4xf32>, vector<64x64xf32> -> vector<64x64xf32>
    %cst_24 = arith.constant dense<0xFF800000> : vector<64xf32>
    %58 = vector.multi_reduction <maximumf>, %57, %cst_24 [1] : vector<64x64xf32> to vector<64xf32>
    %59 = vector.shape_cast %58 : vector<64xf32> to vector<64x1xf32>
    %60 = vector.broadcast %59 : vector<64x1xf32> to vector<64x64xf32>
    %61 = arith.subf %57, %60 : vector<64x64xf32>
    %62 = math.exp %61 : vector<64x64xf32>
    %cst_25 = arith.constant dense<0.000000e+00> : vector<64xf32>
    %63 = vector.multi_reduction <add>, %62, %cst_25 [1] : vector<64x64xf32> to vector<64xf32>
    %64 = vector.shape_cast %63 : vector<64xf32> to vector<64x1xf32>
    %cst_26 = arith.constant 1.000000e+00 : f32
    %65 = vector.broadcast %cst_26 : f32 to vector<64x1xf32>
    %66 = arith.divf %65, %64 : vector<64x1xf32>
    %cst_27 = arith.constant dense<0.000000e+00> : vector<64x4xf32>
    %67 = tpu.matmul %62, %56, %cst_27 {dimension_numbers = #tpu.dot_dimension_numbers<[1], [0], [0], [1], [0, 0, 1, 1], [], []>} : vector<64x64xf32>, vector<64x4xf32>, vector<64x4xf32> -> vector<64x4xf32>
    %68 = vector.broadcast %66 : vector<64x1xf32> to vector<64x4xf32>
    %69 = arith.mulf %67, %68 : vector<64x4xf32>
    %70 = tpu.concatenate %53, %69 in 1 : vector<64x4xf32>, vector<64x4xf32> -> vector<64x8xf32>
    %c0_28 = arith.constant 0 : index
    %c0_29 = arith.constant 0 : index
    %71 = vector.load %arg7[%c0_28, %c0_29] : memref<8x8xf32, #tpu.memory_space<vmem>>, vector<8x8xf32>
    %cst_30 = arith.constant dense<0.000000e+00> : vector<64x8xf32>
    %72 = tpu.matmul %70, %71, %cst_30 {dimension_numbers = #tpu.dot_dimension_numbers<[1], [1], [0], [0], [0, 0, 1, 0], [], []>} : vector<64x8xf32>, vector<8x8xf32>, vector<64x8xf32> -> vector<64x8xf32>
    %c0_31 = arith.constant 0 : index
    %c0_32 = arith.constant 0 : index
    %73 = vector.load %arg10[%c0_31, %c0_32] : memref<64x8xf32, #tpu.memory_space<vmem>>, vector<64x8xf32>
    tpu.vector_store %arg10[%c0_31, %c0_32], %72 {strides = array<i32>} : memref<64x8xf32, #tpu.memory_space<vmem>>, vector<64x8xf32>,
    return
  }
  func.func @transform_0(%arg0: i32) -> (i32, i32) {
    %c0_i32 = arith.constant 0 : i32
    %c0_i32_0 = arith.constant 0 : i32
    return %arg0, %c0_i32 : i32, i32
  }
  func.func @transform_1(%arg0: i32) -> (i32, i32) {
    %c0_i32 = arith.constant 0 : i32
    %c0_i32_0 = arith.constant 0 : i32
    return %arg0, %c0_i32 : i32, i32
  }
  func.func @transform_2(%arg0: i32) -> (i32, i32) {
    %c0_i32 = arith.constant 0 : i32
    %c0_i32_0 = arith.constant 0 : i32
    return %arg0, %c0_i32 : i32, i32
  }
  func.func @transform_3(%arg0: i32) -> (i32, i32) {
    %c0_i32 = arith.constant 0 : i32
    %c0_i32_0 = arith.constant 0 : i32
    %c0_i32_1 = arith.constant 0 : i32
    return %c0_i32, %c0_i32_0 : i32, i32
  }
  func.func @transform_4(%arg0: i32) -> (i32, i32) {
    %c0_i32 = arith.constant 0 : i32
    %c0_i32_0 = arith.constant 0 : i32
    %c0_i32_1 = arith.constant 0 : i32
    return %c0_i32, %c0_i32_0 : i32, i32
  }
  func.func @transform_5(%arg0: i32) -> (i32, i32) {
    %c0_i32 = arith.constant 0 : i32
    %c0_i32_0 = arith.constant 0 : i32
    %c0_i32_1 = arith.constant 0 : i32
    return %c0_i32, %c0_i32_0 : i32, i32
  }
  func.func @transform_6(%arg0: i32) -> (i32, i32) {
    %c0_i32 = arith.constant 0 : i32
    %c0_i32_0 = arith.constant 0 : i32
    %c0_i32_1 = arith.constant 0 : i32
    return %c0_i32, %c0_i32_0 : i32, i32
  }
  func.func @transform_7(%arg0: i32) -> (i32, i32) {
    %c0_i32 = arith.constant 0 : i32
    %c0_i32_0 = arith.constant 0 : i32
    %c0_i32_1 = arith.constant 0 : i32
    return %c0_i32, %c0_i32_0 : i32, i32
  }
  func.func @transform_8(%arg0: i32) -> (i32, i32) {
    %c0_i32 = arith.constant 0 : i32
    %c0_i32_0 = arith.constant 0 : i32
    %c0_i32_1 = arith.constant 0 : i32
    return %c0_i32, %c0_i32_0 : i32, i32
  }
  func.func @transform_9(%arg0: i32) -> (i32, i32) {
    %c0_i32 = arith.constant 0 : i32
    %c0_i32_0 = arith.constant 0 : i32
    return %arg0, %c0_i32 : i32, i32
  }
}

</mosaic_0001>

<llo_original>
// kernel: tpu_custom_call.1
$region0: #{tpu_custom_call.1}
  #allocation0 [shape = 'u32[]', space=smem, size = 0x4, offset = 0x4, fixed_abs, tag = 'smem constant byte address 0x4 - core index']
  #allocation1 [shape = 'u32[144,128]{1,0:T(1,128)}', space=vmem, size = 0x12000, scoped, tag = 'internal scratch']
  %s0 = inlined_call_operand.vmem [shape: f32[128,8], index: 0, kind: input, shape index: {}]
  %s1 = inlined_call_operand.vmem [shape: f32[128,8], index: 1, kind: input, shape index: {}]
  %s2 = inlined_call_operand.vmem [shape: f32[128,8], index: 2, kind: input, shape index: {}]
  %s3 = inlined_call_operand.vmem [shape: f32[8,8], index: 3, kind: input, shape index: {}]
  %s4 = inlined_call_operand.vmem [shape: f32[8,8], index: 4, kind: input, shape index: {}]
  %s5 = inlined_call_operand.vmem [shape: f32[8,8], index: 5, kind: input, shape index: {}]
  %s6 = inlined_call_operand.vmem [shape: f32[8,8], index: 6, kind: input, shape index: {}]
  %s7 = inlined_call_operand.vmem [shape: f32[64,8], index: 7, kind: input, shape index: {}]
  %s8 = inlined_call_operand.vmem [shape: f32[64,8], index: 8, kind: input, shape index: {}]
  %s9 = inlined_call_operand.vmem [shape: f32[128,8], index: 9, kind: output, shape index: {}]
  %s10 = sld [smem:[#allocation0]]
  $region69: #{tpu_custom_call.1} parent=0
    _
  %s12 = ssub.s32 1, %s10
  %s13 = scalar_select 0, %s12, %s10
  loop: start=0, step=1, limit=4
  $region2: #{tpu_custom_call.1} parent=0 // loop_pre_header
    _
  $region3: #{tpu_custom_call.1} parent=0 // loop_header
    %s15 = sphi 0, %s19
    %p16 = scmp.ge.s32.totalorder %s15, 4
    %s25 = sphi 0, %s27
    %s28 = sphi 0, %s25
    %s29 = sphi 0, %s28
    %s45 = sphi 0, %s29
    %s51 = sphi 0, %s53
    %s54 = sphi 0, %s51
    %s55 = sphi 0, %s54
    %s71 = sphi 0, %s55
    %s77 = sphi 0, %s79
    %s80 = sphi 0, %s77
    %s81 = sphi 0, %s80
    %s97 = sphi 0, %s81
    %s101 = sphi 0, %s101
    %s103 = sphi 0, %s101
    %s104 = sphi 0, %s103
    %s118 = sphi 0, %s104
    %s122 = sphi 0, %s122
    %s124 = sphi 0, %s122
    %s125 = sphi 0, %s124
    %s139 = sphi 0, %s125
    %s143 = sphi 0, %s143
    %s145 = sphi 0, %s143
    %s146 = sphi 0, %s145
    %s160 = sphi 0, %s146
    %s164 = sphi 0, %s164
    %s166 = sphi 0, %s164
    %s167 = sphi 0, %s166
    %s181 = sphi 0, %s167
    %s185 = sphi 0, %s185
    %s187 = sphi 0, %s185
    %s188 = sphi 0, %s187
    %s202 = sphi 0, %s188
    %s206 = sphi 0, %s206
    %s208 = sphi 0, %s206
    %s209 = sphi 0, %s208
    %s223 = sphi 0, %s209
    %s229 = sphi 0, %s231
    %s232 = sphi 0, %s229
    %s233 = sphi 0, %s232
    %s249 = sphi 0, %s233
  $region4: #{tpu_custom_call.1} parent=0 // loop_header_branch
    %18 = sbr.rel (%p16) target = $region8
  $region5: #{tpu_custom_call.1} parent=0 // loop_body
    %s20 = ssub.s32 %s15, 1
    %s21 = ssub.s32 %s15, 2
    %s22 = sadd.s32 %s15, 1
    %s23 = ssub.s32 %s15, %s22
    %p24 = scmp.eq.s32.totalorder %s23, 0
    %s26 = sadd.s32 %s25, 1
    %s27 = scalar_select %p24, %s25, %s26
    %p30 = pneg %p24
    %p31 = scmp.eq.s32.totalorder %s15, 1
    %p32 = por %p30, %p31
    %p33 = scmp.ne.s32.totalorder %s25, %s28
    %p34 = scmp.eq.s32.totalorder %s15, 0
    %p35 = por %p33, %p34
    %p36 = scmp.ne.s32.totalorder %s25, %s28
    %p37 = scmp.eq.s32.totalorder %s20, 1
    %p38 = por %p36, %p37
    %p39 = scmp.ne.s32.totalorder %s28, %s29
    %p40 = scmp.eq.s32.totalorder %s20, 0
    %p41 = por %p39, %p40
    %p42 = scmp.ne.s32.totalorder %s28, %s29
    %p43 = scmp.eq.s32.totalorder %s21, 1
    %p44 = por %p42, %p43
    %p46 = scmp.ne.s32.totalorder %s29, %s45
    %p47 = scmp.eq.s32.totalorder %s21, 0
    %p48 = por %p46, %p47
    %s49 = ssub.s32 %s15, %s22
    %p50 = scmp.eq.s32.totalorder %s49, 0
    %s52 = sadd.s32 %s51, 1
    %s53 = scalar_select %p50, %s51, %s52
    %p56 = pneg %p50
    %p57 = scmp.eq.s32.totalorder %s15, 1
    %p58 = por %p56, %p57
    %p59 = scmp.ne.s32.totalorder %s51, %s54
    %p60 = scmp.eq.s32.totalorder %s15, 0
    %p61 = por %p59, %p60
    %p62 = scmp.ne.s32.totalorder %s51, %s54
    %p63 = scmp.eq.s32.totalorder %s20, 1
    %p64 = por %p62, %p63
    %p65 = scmp.ne.s32.totalorder %s54, %s55
    %p66 = scmp.eq.s32.totalorder %s20, 0
    %p67 = por %p65, %p66
    %p68 = scmp.ne.s32.totalorder %s54, %s55
    %p69 = scmp.eq.s32.totalorder %s21, 1
    %p70 = por %p68, %p69
    %p72 = scmp.ne.s32.totalorder %s55, %s71
    %p73 = scmp.eq.s32.totalorder %s21, 0
    %p74 = por %p72, %p73
    %s75 = ssub.s32 %s15, %s22
    %p76 = scmp.eq.s32.totalorder %s75, 0
    %s78 = sadd.s32 %s77, 1
    %s79 = scalar_select %p76, %s77, %s78
    %p82 = pneg %p76
    %p83 = scmp.eq.s32.totalorder %s15, 1
    %p84 = por %p82, %p83
    %p85 = scmp.ne.s32.totalorder %s77, %s80
    %p86 = scmp.eq.s32.totalorder %s15, 0
    %p87 = por %p85, %p86
    %p88 = scmp.ne.s32.totalorder %s77, %s80
    %p89 = scmp.eq.s32.totalorder %s20, 1
    %p90 = por %p88, %p89
    %p91 = scmp.ne.s32.totalorder %s80, %s81
    %p92 = scmp.eq.s32.totalorder %s20, 0
    %p93 = por %p91, %p92
    %p94 = scmp.ne.s32.totalorder %s80, %s81
    %p95 = scmp.eq.s32.totalorder %s21, 1
    %p96 = por %p94, %p95
    %p98 = scmp.ne.s32.totalorder %s81, %s97
    %p99 = scmp.eq.s32.totalorder %s21, 0
    %p100 = por %p98, %p99
    %s102 = sadd.s32 %s101, 1
    %p105 = scmp.eq.s32.totalorder %s15, 1
    %p106 = scmp.ne.s32.totalorder %s101, %s103
    %p107 = scmp.eq.s32.totalorder %s15, 0
    %p108 = por %p106, %p107
    %p109 = scmp.ne.s32.totalorder %s101, %s103
    %p110 = scmp.eq.s32.totalorder %s20, 1
    %p111 = por %p109, %p110
    %p112 = scmp.ne.s32.totalorder %s103, %s104
    %p113 = scmp.eq.s32.totalorder %s20, 0
    %p114 = por %p112, %p113
    %p115 = scmp.ne.s32.totalorder %s103, %s104
    %p116 = scmp.eq.s32.totalorder %s21, 1
    %p117 = por %p115, %p116
    %p119 = scmp.ne.s32.totalorder %s104, %s118
    %p120 = scmp.eq.s32.totalorder %s21, 0
    %p121 = por %p119, %p120
    %s123 = sadd.s32 %s122, 1
    %p126 = scmp.eq.s32.totalorder %s15, 1
    %p127 = scmp.ne.s32.totalorder %s122, %s124
    %p128 = scmp.eq.s32.totalorder %s15, 0
    %p129 = por %p127, %p128
    %p130 = scmp.ne.s32.totalorder %s122, %s124
    %p131 = scmp.eq.s32.totalorder %s20, 1
    %p132 = por %p130, %p131
    %p133 = scmp.ne.s32.totalorder %s124, %s125
    %p134 = scmp.eq.s32.totalorder %s20, 0
    %p135 = por %p133, %p134
    %p136 = scmp.ne.s32.totalorder %s124, %s125
    %p137 = scmp.eq.s32.totalorder %s21, 1
    %p138 = por %p136, %p137
    %p140 = scmp.ne.s32.totalorder %s125, %s139
    %p141 = scmp.eq.s32.totalorder %s21, 0
    %p142 = por %p140, %p141
    %s144 = sadd.s32 %s143, 1
    %p147 = scmp.eq.s32.totalorder %s15, 1
    %p148 = scmp.ne.s32.totalorder %s143, %s145
    %p149 = scmp.eq.s32.totalorder %s15, 0
    %p150 = por %p148, %p149
    %p151 = scmp.ne.s32.totalorder %s143, %s145
    %p152 = scmp.eq.s32.totalorder %s20, 1
    %p153 = por %p151, %p152
    %p154 = scmp.ne.s32.totalorder %s145, %s146
    %p155 = scmp.eq.s32.totalorder %s20, 0
    %p156 = por %p154, %p155
    %p157 = scmp.ne.s32.totalorder %s145, %s146
    %p158 = scmp.eq.s32.totalorder %s21, 1
    %p159 = por %p157, %p158
    %p161 = scmp.ne.s32.totalorder %s146, %s160
    %p162 = scmp.eq.s32.totalorder %s21, 0
    %p163 = por %p161, %p162
    %s165 = sadd.s32 %s164, 1
    %p168 = scmp.eq.s32.totalorder %s15, 1
    %p169 = scmp.ne.s32.totalorder %s164, %s166
    %p170 = scmp.eq.s32.totalorder %s15, 0
    %p171 = por %p169, %p170
    %p172 = scmp.ne.s32.totalorder %s164, %s166
    %p173 = scmp.eq.s32.totalorder %s20, 1
    %p174 = por %p172, %p173
    %p175 = scmp.ne.s32.totalorder %s166, %s167
    %p176 = scmp.eq.s32.totalorder %s20, 0
    %p177 = por %p175, %p176
    %p178 = scmp.ne.s32.totalorder %s166, %s167
    %p179 = scmp.eq.s32.totalorder %s21, 1
    %p180 = por %p178, %p179
    %p182 = scmp.ne.s32.totalorder %s167, %s181
    %p183 = scmp.eq.s32.totalorder %s21, 0
    %p184 = por %p182, %p183
    %s186 = sadd.s32 %s185, 1
    %p189 = scmp.eq.s32.totalorder %s15, 1
    %p190 = scmp.ne.s32.totalorder %s185, %s187
    %p191 = scmp.eq.s32.totalorder %s15, 0
    %p192 = por %p190, %p191
    %p193 = scmp.ne.s32.totalorder %s185, %s187
    %p194 = scmp.eq.s32.totalorder %s20, 1
    %p195 = por %p193, %p194
    %p196 = scmp.ne.s32.totalorder %s187, %s188
    %p197 = scmp.eq.s32.totalorder %s20, 0
    %p198 = por %p196, %p197
    %p199 = scmp.ne.s32.totalorder %s187, %s188
    %p200 = scmp.eq.s32.totalorder %s21, 1
    %p201 = por %p199, %p200
    %p203 = scmp.ne.s32.totalorder %s188, %s202
    %p204 = scmp.eq.s32.totalorder %s21, 0
    %p205 = por %p203, %p204
    %s207 = sadd.s32 %s206, 1
    %p210 = scmp.eq.s32.totalorder %s15, 1
    %p211 = scmp.ne.s32.totalorder %s206, %s208
    %p212 = scmp.eq.s32.totalorder %s15, 0
    %p213 = por %p211, %p212
    %p214 = scmp.ne.s32.totalorder %s206, %s208
    %p215 = scmp.eq.s32.totalorder %s20, 1
    %p216 = por %p214, %p215
    %p217 = scmp.ne.s32.totalorder %s208, %s209
    %p218 = scmp.eq.s32.totalorder %s20, 0
    %p219 = por %p217, %p218
    %p220 = scmp.ne.s32.totalorder %s208, %s209
    %p221 = scmp.eq.s32.totalorder %s21, 1
    %p222 = por %p220, %p221
    %p224 = scmp.ne.s32.totalorder %s209, %s223
    %p225 = scmp.eq.s32.totalorder %s21, 0
    %p226 = por %p224, %p225
    %s227 = ssub.s32 %s15, %s22
    %p228 = scmp.eq.s32.totalorder %s227, 0
    %s230 = sadd.s32 %s229, 1
    %s231 = scalar_select %p228, %s229, %s230
    %p234 = pneg %p228
    %p235 = scmp.eq.s32.totalorder %s15, 1
    %p236 = por %p234, %p235
    %p237 = scmp.ne.s32.totalorder %s229, %s232
    %p238 = scmp.eq.s32.totalorder %s15, 0
    %p239 = por %p237, %p238
    %p240 = scmp.ne.s32.totalorder %s229, %s232
    %p241 = scmp.eq.s32.totalorder %s20, 1
    %p242 = por %p240, %p241
    %p243 = scmp.ne.s32.totalorder %s232, %s233
    %p244 = scmp.eq.s32.totalorder %s20, 0
    %p245 = por %p243, %p244
    %p246 = scmp.ne.s32.totalorder %s232, %s233
    %p247 = scmp.eq.s32.totalorder %s21, 1
    %p248 = por %p246, %p247
    %p250 = scmp.ne.s32.totalorder %s233, %s249
    %p251 = scmp.eq.s32.totalorder %s21, 0
    %p252 = por %p250, %p251
    %p253 = scmp.le.s32.totalorder 1, %s15
    %p254 = scmp.lt.s32.totalorder %s15, 3
    %p255 = pnand %p253, %p254
    %p256 = pneg %p255
    // Predicated region
    $region9: #{tpu_custom_call.1} parent=5 // pred_check
      _
    $region10: #{tpu_custom_call.1} parent=5 // pred_check_branch
      %258 = sbr.rel (%p255) target = $region12
    $region11: #{tpu_custom_call.1} parent=5 // pred_region
      %s259 = ssub.s32 %s15, 1
      // Predicated region
      $region13: #{tpu_custom_call.1} parent=11 // pred_check
        %p260 = pneg %p114
      $region14: #{tpu_custom_call.1} parent=11 // pred_check_branch
        %262 = sbr.rel (%p260) target = $region16
      $region15: #{tpu_custom_call.1} parent=11 // pred_region
        _
      $region16: #{tpu_custom_call.1} parent=11 // pred_fallthru
        _
      // Predicated region
      $region17: #{tpu_custom_call.1} parent=11 // pred_check
        %p263 = pneg %p135
      $region18: #{tpu_custom_call.1} parent=11 // pred_check_branch
        %265 = sbr.rel (%p263) target = $region20
      $region19: #{tpu_custom_call.1} parent=11 // pred_region
        _
      $region20: #{tpu_custom_call.1} parent=11 // pred_fallthru
        _
      // Predicated region
      $region21: #{tpu_custom_call.1} parent=11 // pred_check
        %p266 = pneg %p156
      $region22: #{tpu_custom_call.1} parent=11 // pred_check_branch
        %268 = sbr.rel (%p266) target = $region24
      $region23: #{tpu_custom_call.1} parent=11 // pred_region
        _
      $region24: #{tpu_custom_call.1} parent=11 // pred_fallthru
        _
      // Predicated region
      $region25: #{tpu_custom_call.1} parent=11 // pred_check
        %p269 = pneg %p177
      $region26: #{tpu_custom_call.1} parent=11 // pred_check_branch
        %271 = sbr.rel (%p269) target = $region28
      $region27: #{tpu_custom_call.1} parent=11 // pred_region
        _
      $region28: #{tpu_custom_call.1} parent=11 // pred_fallthru
        _
      // Predicated region
      $region29: #{tpu_custom_call.1} parent=11 // pred_check
        %p272 = pneg %p198
      $region30: #{tpu_custom_call.1} parent=11 // pred_check_branch
        %274 = sbr.rel (%p272) target = $region32
      $region31: #{tpu_custom_call.1} parent=11 // pred_region
        _
      $region32: #{tpu_custom_call.1} parent=11 // pred_fallthru
        _
      // Predicated region
      $region33: #{tpu_custom_call.1} parent=11 // pred_check
        %p275 = pneg %p219
      $region34: #{tpu_custom_call.1} parent=11 // pred_check_branch
        %277 = sbr.rel (%p275) target = $region36
      $region35: #{tpu_custom_call.1} parent=11 // pred_region
        _
      $region36: #{tpu_custom_call.1} parent=11 // pred_fallthru
        _
    $region12: #{tpu_custom_call.1} parent=5 // pred_fallthru
      _
    %p278 = scmp.lt.s32.totalorder %s15, 2
    // Predicated region
    $region37: #{tpu_custom_call.1} parent=5 // pred_check
      %p279 = pneg %p278
    $region38: #{tpu_custom_call.1} parent=5 // pred_check_branch
      %281 = sbr.rel (%p279) target = $region40
    $region39: #{tpu_custom_call.1} parent=5 // pred_region
      // Predicated region
      $region41: #{tpu_custom_call.1} parent=39 // pred_check
        %p282 = pneg %p35
      $region42: #{tpu_custom_call.1} parent=39 // pred_check_branch
        %284 = sbr.rel (%p282) target = $region44
      $region43: #{tpu_custom_call.1} parent=39 // pred_region
        %s285 = smul.u32 8, %s15
        %p286 = scmp.lt.s32.totalorder %s285, 15
        %s287 = scalar_select %p286, %s285, 15
        %s288 = smul.addr %s287, 8
        %s289 = scalar_lea.vmem %s0, %s288
        %s290 = smul.u32 8, %s15
      $region44: #{tpu_custom_call.1} parent=39 // pred_fallthru
        _
      // Predicated region
      $region45: #{tpu_custom_call.1} parent=39 // pred_check
        %p291 = pneg %p61
      $region46: #{tpu_custom_call.1} parent=39 // pred_check_branch
        %293 = sbr.rel (%p291) target = $region48
      $region47: #{tpu_custom_call.1} parent=39 // pred_region
        %s294 = smul.u32 8, %s15
        %p295 = scmp.lt.s32.totalorder %s294, 15
        %s296 = scalar_select %p295, %s294, 15
        %s297 = smul.addr %s296, 8
        %s298 = scalar_lea.vmem %s1, %s297
        %s299 = smul.u32 8, %s15
      $region48: #{tpu_custom_call.1} parent=39 // pred_fallthru
        _
      // Predicated region
      $region49: #{tpu_custom_call.1} parent=39 // pred_check
        %p300 = pneg %p87
      $region50: #{tpu_custom_call.1} parent=39 // pred_check_branch
        %302 = sbr.rel (%p300) target = $region52
      $region51: #{tpu_custom_call.1} parent=39 // pred_region
        %s303 = smul.u32 8, %s15
        %p304 = scmp.lt.s32.totalorder %s303, 15
        %s305 = scalar_select %p304, %s303, 15
        %s306 = smul.addr %s305, 8
        %s307 = scalar_lea.vmem %s2, %s306
        %s308 = smul.u32 8, %s15
      $region52: #{tpu_custom_call.1} parent=39 // pred_fallthru
        _
    $region40: #{tpu_custom_call.1} parent=5 // pred_fallthru
      _
    %p309 = scmp.le.s32.totalorder 1, %s15
    %p310 = scmp.lt.s32.totalorder %s15, 3
    %p311 = pnand %p309, %p310
    %p312 = pneg %p311
    // Predicated region
    $region53: #{tpu_custom_call.1} parent=5 // pred_check
      _
    $region54: #{tpu_custom_call.1} parent=5 // pred_check_branch
      %314 = sbr.rel (%p311) target = $region56
    $region55: #{tpu_custom_call.1} parent=5 // pred_region
      %s315 = ssub.s32 %s15, 1
      %s316 = smul.u32 8, %s20
      %p317 = scmp.lt.s32.totalorder %s316, 15
      %s318 = scalar_select %p317, %s316, 15
      %s319 = smul.addr %s318, 8
      %s320 = scalar_lea.vmem %s0, %s319
      %p321 = pneg %p41
      %p322 = pneg %p38
      %s323 = smul.u32 8, %s20
      %p324 = scmp.lt.s32.totalorder %s323, 15
      %s325 = scalar_select %p324, %s323, 15
      %s326 = smul.addr %s325, 8
      %s327 = scalar_lea.vmem %s1, %s326
      %p328 = pneg %p67
      %p329 = pneg %p64
      %s330 = smul.u32 8, %s20
      %p331 = scmp.lt.s32.totalorder %s330, 15
      %s332 = scalar_select %p331, %s330, 15
      %s333 = smul.addr %s332, 8
      %s334 = scalar_lea.vmem %s2, %s333
      %p335 = pneg %p93
      %p336 = pneg %p90
      %p337 = pneg %p114
      %p338 = pneg %p111
      %p339 = pneg %p135
      %p340 = pneg %p132
      %p341 = pneg %p156
      %p342 = pneg %p153
      %p343 = pneg %p177
      %p344 = pneg %p174
      %p345 = pneg %p198
      %p346 = pneg %p195
      %p347 = pneg %p219
      %p348 = pneg %p216
      %p349 = pneg %p245
      %p350 = pneg %p242
      %s351 = smul.u32 8, %s20
      %p352 = scmp.lt.s32.totalorder %s351, 15
      %s353 = scalar_select %p352, %s351, 15
      %s354 = smul.addr %s353, 8
      %s355 = scalar_lea.vmem %s9, %s354
      %s356 = smul.u32 8, %s20
      %p357 = scmp.lt.s32.totalorder %s356, 15
      %s358 = scalar_select %p357, %s356, 15
      %s359 = smul.addr %s358, 8
      %s360 = scalar_lea.vmem %s0, %s359
      %s361 = smul.u32 8, %s20
      %s362 = smul.u32 8, %s20
      %p363 = scmp.lt.s32.totalorder %s362, 15
      %s364 = scalar_select %p363, %s362, 15
      %s365 = smul.addr %s364, 8
      %s366 = scalar_lea.vmem %s1, %s365
      %s367 = smul.u32 8, %s20
      %s368 = smul.u32 8, %s20
      %p369 = scmp.lt.s32.totalorder %s368, 15
      %s370 = scalar_select %p369, %s368, 15
      %s371 = smul.addr %s370, 8
      %s372 = scalar_lea.vmem %s2, %s371
      %s373 = smul.u32 8, %s20
      %s374 = smul.u32 8, %s20
      %p375 = scmp.lt.s32.totalorder %s374, 15
      %s376 = scalar_select %p375, %s374, 15
      %s377 = smul.addr %s376, 8
      %s378 = scalar_lea.vmem %s9, %s377
      %s379 = smul.u32 8, %s20
      %v380 = vld [vmem:[%s360] sm:$0xff]
      %v381 = vld [vmem:[%s360 + $0x8] sm:$0xff]
      %v382 = vld [vmem:[%s360 + $0x10] sm:$0xff]
      %v383 = vld [vmem:[%s360 + $0x18] sm:$0xff]
      %v384 = vld [vmem:[%s360 + $0x20] sm:$0xff]
      %v385 = vld [vmem:[%s360 + $0x28] sm:$0xff]
      %v386 = vld [vmem:[%s360 + $0x30] sm:$0xff]
      %v387 = vld [vmem:[%s360 + $0x38] sm:$0xff]
      %v388 = vld [vmem:[%s3] sm:$0xff]
      %vm389 = vcmask 64512
      %v391 = vsel %vm389, %v380, 0
      %v394 = vsel %vm389, %v381, 0
      %v397 = vsel %vm389, %v382, 0
      %v400 = vsel %vm389, %v383, 0
      %v403 = vsel %vm389, %v384, 0
      %v406 = vsel %vm389, %v385, 0
      %v409 = vsel %vm389, %v386, 0
      %v412 = vsel %vm389, %v387, 0
      %v415 = vsel %vm389, %v388, 0
      %417 = vmatprep.subr.mxu0 0.0
      %418 = vmatpush1.xpose.msra.mxu0 0.0
      %419 = vmatprep.subr.mxu0 0.0
      %420 = vmatpush1.xpose.msra.mxu0 0.0
      %421 = vmatprep.subr.mxu0 0.0
      %422 = vmatpush1.xpose.msra.mxu0 0.0
      %423 = vmatprep.subr.mxu0 0.0
      %424 = vmatpush1.xpose.msra.mxu0 0.0
      %425 = vmatprep.subr.mxu0 0.0
      %426 = vmatpush1.xpose.msra.mxu0 0.0
      %427 = vmatprep.subr.mxu0 0.0
      %428 = vmatpush1.xpose.msra.mxu0 0.0
      %429 = vmatprep.subr.mxu0 0.0
      %430 = vmatpush1.xpose.msra.mxu0 0.0
      %431 = vmatprep.subr.mxu0 0.0
      %432 = vmatpush1.xpose.msra.mxu0 0.0
      %433 = vmatprep.subr.mxu0 0.0
      %434 = vmatpush1.xpose.msra.mxu0 0.0
      %435 = vmatprep.subr.mxu0 0.0
      %436 = vmatpush1.xpose.msra.mxu0 0.0
      %437 = vmatprep.subr.mxu0 0.0
      %438 = vmatpush1.xpose.msra.mxu0 0.0
      %439 = vmatprep.subr.mxu0 0.0
      %440 = vmatpush1.xpose.msra.mxu0 0.0
      %441 = vmatprep.subr.mxu0 0.0
      %442 = vmatpush1.xpose.msra.mxu0 0.0
      %443 = vmatprep.subr.mxu0 0.0
      %444 = vmatpush1.xpose.msra.mxu0 0.0
      %445 = vmatprep.subr.mxu0 0.0
      %446 = vmatpush1.xpose.msra.mxu0 0.0
      %447 = vmatprep.subr.mxu0 0.0
      %448 = vmatpush1.xpose.msra.mxu0 %v415
      %449 = vmatprep.subr.mxu0 0.0
      %450 = vmatpush2.xpose.msra.mxu0 0.0
      %451 = vmatprep.subr.mxu0 0.0
      %452 = vmatpush2.xpose.msra.mxu0 0.0
      %453 = vmatprep.subr.mxu0 0.0
      %454 = vmatpush2.xpose.msra.mxu0 0.0
      %455 = vmatprep.subr.mxu0 0.0
      %456 = vmatpush2.xpose.msra.mxu0 0.0
      %457 = vmatprep.subr.mxu0 0.0
      %458 = vmatpush2.xpose.msra.mxu0 0.0
      %459 = vmatprep.subr.mxu0 0.0
      %460 = vmatpush2.xpose.msra.mxu0 0.0
      %461 = vmatprep.subr.mxu0 0.0
      %462 = vmatpush2.xpose.msra.mxu0 0.0
      %463 = vmatprep.subr.mxu0 0.0
      %464 = vmatpush2.xpose.msra.mxu0 0.0
      %465 = vmatprep.subr.mxu0 0.0
      %466 = vmatpush2.xpose.msra.mxu0 0.0
      %467 = vmatprep.subr.mxu0 0.0
      %468 = vmatpush2.xpose.msra.mxu0 0.0
      %469 = vmatprep.subr.mxu0 0.0
      %470 = vmatpush2.xpose.msra.mxu0 0.0
      %471 = vmatprep.subr.mxu0 0.0
      %472 = vmatpush2.xpose.msra.mxu0 0.0
      %473 = vmatprep.subr.mxu0 0.0
      %474 = vmatpush2.xpose.msra.mxu0 0.0
      %475 = vmatprep.subr.mxu0 0.0
      %476 = vmatpush2.xpose.msra.mxu0 0.0
      %477 = vmatprep.subr.mxu0 0.0
      %478 = vmatpush2.xpose.msra.mxu0 0.0
      %479 = vmatprep.subr.mxu0 0.0
      %480 = vmatpush2.xpose.msra.mxu0 0.0
      %481 = vmatprep.mubr.f32.mxu0 0.0
      %482 = vmatmul.mubr.f32.gmra.mxu0 %v391
      %v483 = vpop.f32.mrf.mxu0
      %v484 = vadd.f32 0.0, %v483
      %v485 = vpop.f32.mrf.mxu0
      %486 = vmatprep.mubr.f32.mxu0 0.0
      %487 = vmatmul.mubr.f32.gmra.mxu0 %v394
      %v488 = vpop.f32.mrf.mxu0
      %v489 = vadd.f32 0.0, %v488
      %v490 = vpop.f32.mrf.mxu0
      %491 = vmatprep.mubr.f32.mxu0 0.0
      %492 = vmatmul.mubr.f32.gmra.mxu0 %v397
      %v493 = vpop.f32.mrf.mxu0
      %v494 = vadd.f32 0.0, %v493
      %v495 = vpop.f32.mrf.mxu0
      %496 = vmatprep.mubr.f32.mxu0 0.0
      %497 = vmatmul.mubr.f32.gmra.mxu0 %v400
      %v498 = vpop.f32.mrf.mxu0
      %v499 = vadd.f32 0.0, %v498
      %v500 = vpop.f32.mrf.mxu0
      %501 = vmatprep.mubr.f32.mxu0 0.0
      %502 = vmatmul.mubr.f32.gmra.mxu0 %v403
      %v503 = vpop.f32.mrf.mxu0
      %v504 = vadd.f32 0.0, %v503
      %v505 = vpop.f32.mrf.mxu0
      %506 = vmatprep.mubr.f32.mxu0 0.0
      %507 = vmatmul.mubr.f32.gmra.mxu0 %v406
      %v508 = vpop.f32.mrf.mxu0
      %v509 = vadd.f32 0.0, %v508
      %v510 = vpop.f32.mrf.mxu0
      %511 = vmatprep.mubr.f32.mxu0 0.0
      %512 = vmatmul.mubr.f32.gmra.mxu0 %v409
      %v513 = vpop.f32.mrf.mxu0
      %v514 = vadd.f32 0.0, %v513
      %v515 = vpop.f32.mrf.mxu0
      %516 = vmatprep.mubr.f32.mxu0 0.0
      %517 = vmatmul.mubr.f32.gmra.mxu0 %v412
      %v518 = vpop.f32.mrf.mxu0
      %v519 = vadd.f32 0.0, %v518
      %v520 = vpop.f32.mrf.mxu0
      %521 = vdwg.mxu0
      %v522 = vld [vmem:[%s366] sm:$0xff]
      %v523 = vld [vmem:[%s366 + $0x8] sm:$0xff]
      %v524 = vld [vmem:[%s366 + $0x10] sm:$0xff]
      %v525 = vld [vmem:[%s366 + $0x18] sm:$0xff]
      %v526 = vld [vmem:[%s366 + $0x20] sm:$0xff]
      %v527 = vld [vmem:[%s366 + $0x28] sm:$0xff]
      %v528 = vld [vmem:[%s366 + $0x30] sm:$0xff]
      %v529 = vld [vmem:[%s366 + $0x38] sm:$0xff]
      %v530 = vld [vmem:[%s4] sm:$0xff]
      %v532 = vsel %vm389, %v522, 0
      %v535 = vsel %vm389, %v523, 0
      %v538 = vsel %vm389, %v524, 0
      %v541 = vsel %vm389, %v525, 0
      %v544 = vsel %vm389, %v526, 0
      %v547 = vsel %vm389, %v527, 0
      %v550 = vsel %vm389, %v528, 0
      %v553 = vsel %vm389, %v529, 0
      %v556 = vsel %vm389, %v530, 0
      %558 = vmatprep.subr.mxu0 0.0
      %559 = vmatpush1.xpose.msra.mxu0 0.0
      %560 = vmatprep.subr.mxu0 0.0
      %561 = vmatpush1.xpose.msra.mxu0 0.0
      %562 = vmatprep.subr.mxu0 0.0
      %563 = vmatpush1.xpose.msra.mxu0 0.0
      %564 = vmatprep.subr.mxu0 0.0
      %565 = vmatpush1.xpose.msra.mxu0 0.0
      %566 = vmatprep.subr.mxu0 0.0
      %567 = vmatpush1.xpose.msra.mxu0 0.0
      %568 = vmatprep.subr.mxu0 0.0
      %569 = vmatpush1.xpose.msra.mxu0 0.0
      %570 = vmatprep.subr.mxu0 0.0
      %571 = vmatpush1.xpose.msra.mxu0 0.0
      %572 = vmatprep.subr.mxu0 0.0
      %573 = vmatpush1.xpose.msra.mxu0 0.0
      %574 = vmatprep.subr.mxu0 0.0
      %575 = vmatpush1.xpose.msra.mxu0 0.0
      %576 = vmatprep.subr.mxu0 0.0
      %577 = vmatpush1.xpose.msra.mxu0 0.0
      %578 = vmatprep.subr.mxu0 0.0
      %579 = vmatpush1.xpose.msra.mxu0 0.0
      %580 = vmatprep.subr.mxu0 0.0
      %581 = vmatpush1.xpose.msra.mxu0 0.0
      %582 = vmatprep.subr.mxu0 0.0
      %583 = vmatpush1.xpose.msra.mxu0 0.0
      %584 = vmatprep.subr.mxu0 0.0
      %585 = vmatpush1.xpose.msra.mxu0 0.0
      %586 = vmatprep.subr.mxu0 0.0
      %587 = vmatpush1.xpose.msra.mxu0 0.0
      %588 = vmatprep.subr.mxu0 0.0
      %589 = vmatpush1.xpose.msra.mxu0 %v556
      %590 = vmatprep.subr.mxu0 0.0
      %591 = vmatpush2.xpose.msra.mxu0 0.0
      %592 = vmatprep.subr.mxu0 0.0
      %593 = vmatpush2.xpose.msra.mxu0 0.0
      %594 = vmatprep.subr.mxu0 0.0
      %595 = vmatpush2.xpose.msra.mxu0 0.0
      %596 = vmatprep.subr.mxu0 0.0
      %597 = vmatpush2.xpose.msra.mxu0 0.0
      %598 = vmatprep.subr.mxu0 0.0
      %599 = vmatpush2.xpose.msra.mxu0 0.0
      %600 = vmatprep.subr.mxu0 0.0
      %601 = vmatpush2.xpose.msra.mxu0 0.0
      %602 = vmatprep.subr.mxu0 0.0
      %603 = vmatpush2.xpose.msra.mxu0 0.0
      %604 = vmatprep.subr.mxu0 0.0
      %605 = vmatpush2.xpose.msra.mxu0 0.0
      %606 = vmatprep.subr.mxu0 0.0
      %607 = vmatpush2.xpose.msra.mxu0 0.0
      %608 = vmatprep.subr.mxu0 0.0
      %609 = vmatpush2.xpose.msra.mxu0 0.0
      %610 = vmatprep.subr.mxu0 0.0
      %611 = vmatpush2.xpose.msra.mxu0 0.0
      %612 = vmatprep.subr.mxu0 0.0
      %613 = vmatpush2.xpose.msra.mxu0 0.0
      %614 = vmatprep.subr.mxu0 0.0
      %615 = vmatpush2.xpose.msra.mxu0 0.0
      %616 = vmatprep.subr.mxu0 0.0
      %617 = vmatpush2.xpose.msra.mxu0 0.0
      %618 = vmatprep.subr.mxu0 0.0
      %619 = vmatpush2.xpose.msra.mxu0 0.0
      %620 = vmatprep.subr.mxu0 0.0
      %621 = vmatpush2.xpose.msra.mxu0 0.0
      %622 = vmatprep.mubr.f32.mxu0 0.0
      %623 = vmatmul.mubr.f32.gmra.mxu0 %v532
      %v624 = vpop.f32.mrf.mxu0
      %v625 = vadd.f32 0.0, %v624
      %v626 = vpop.f32.mrf.mxu0
      %627 = vmatprep.mubr.f32.mxu0 0.0
      %628 = vmatmul.mubr.f32.gmra.mxu0 %v535
      %v629 = vpop.f32.mrf.mxu0
      %v630 = vadd.f32 0.0, %v629
      %v631 = vpop.f32.mrf.mxu0
      %632 = vmatprep.mubr.f32.mxu0 0.0
      %633 = vmatmul.mubr.f32.gmra.mxu0 %v538
      %v634 = vpop.f32.mrf.mxu0
      %v635 = vadd.f32 0.0, %v634
      %v636 = vpop.f32.mrf.mxu0
      %637 = vmatprep.mubr.f32.mxu0 0.0
      %638 = vmatmul.mubr.f32.gmra.mxu0 %v541
      %v639 = vpop.f32.mrf.mxu0
      %v640 = vadd.f32 0.0, %v639
      %v641 = vpop.f32.mrf.mxu0
      %642 = vmatprep.mubr.f32.mxu0 0.0
      %643 = vmatmul.mubr.f32.gmra.mxu0 %v544
      %v644 = vpop.f32.mrf.mxu0
      %v645 = vadd.f32 0.0, %v644
      %v646 = vpop.f32.mrf.mxu0
      %647 = vmatprep.mubr.f32.mxu0 0.0
      %648 = vmatmul.mubr.f32.gmra.mxu0 %v547
      %v649 = vpop.f32.mrf.mxu0
      %v650 = vadd.f32 0.0, %v649
      %v651 = vpop.f32.mrf.mxu0
      %652 = vmatprep.mubr.f32.mxu0 0.0
      %653 = vmatmul.mubr.f32.gmra.mxu0 %v550
      %v654 = vpop.f32.mrf.mxu0
      %v655 = vadd.f32 0.0, %v654
      %v656 = vpop.f32.mrf.mxu0
      %657 = vmatprep.mubr.f32.mxu0 0.0
      %658 = vmatmul.mubr.f32.gmra.mxu0 %v553
      %v659 = vpop.f32.mrf.mxu0
      %v660 = vadd.f32 0.0, %v659
      %v661 = vpop.f32.mrf.mxu0
      %662 = vdwg.mxu0
      %v663 = vld [vmem:[%s372] sm:$0xff]
      %v664 = vld [vmem:[%s372 + $0x8] sm:$0xff]
      %v665 = vld [vmem:[%s372 + $0x10] sm:$0xff]
      %v666 = vld [vmem:[%s372 + $0x18] sm:$0xff]
      %v667 = vld [vmem:[%s372 + $0x20] sm:$0xff]
      %v668 = vld [vmem:[%s372 + $0x28] sm:$0xff]
      %v669 = vld [vmem:[%s372 + $0x30] sm:$0xff]
      %v670 = vld [vmem:[%s372 + $0x38] sm:$0xff]
      %v671 = vld [vmem:[%s5] sm:$0xff]
      %v673 = vsel %vm389, %v663, 0
      %v676 = vsel %vm389, %v664, 0
      %v679 = vsel %vm389, %v665, 0
      %v682 = vsel %vm389, %v666, 0
      %v685 = vsel %vm389, %v667, 0
      %v688 = vsel %vm389, %v668, 0
      %v691 = vsel %vm389, %v669, 0
      %v694 = vsel %vm389, %v670, 0
      %v697 = vsel %vm389, %v671, 0
      %699 = vmatprep.subr.mxu0 0.0
      %700 = vmatpush1.xpose.msra.mxu0 0.0
      %701 = vmatprep.subr.mxu0 0.0
      %702 = vmatpush1.xpose.msra.mxu0 0.0
      %703 = vmatprep.subr.mxu0 0.0
      %704 = vmatpush1.xpose.msra.mxu0 0.0
      %705 = vmatprep.subr.mxu0 0.0
      %706 = vmatpush1.xpose.msra.mxu0 0.0
      %707 = vmatprep.subr.mxu0 0.0
      %708 = vmatpush1.xpose.msra.mxu0 0.0
      %709 = vmatprep.subr.mxu0 0.0
      %710 = vmatpush1.xpose.msra.mxu0 0.0
      %711 = vmatprep.subr.mxu0 0.0
      %712 = vmatpush1.xpose.msra.mxu0 0.0
      %713 = vmatprep.subr.mxu0 0.0
      %714 = vmatpush1.xpose.msra.mxu0 0.0
      %715 = vmatprep.subr.mxu0 0.0
      %716 = vmatpush1.xpose.msra.mxu0 0.0
      %717 = vmatprep.subr.mxu0 0.0
      %718 = vmatpush1.xpose.msra.mxu0 0.0
      %719 = vmatprep.subr.mxu0 0.0
      %720 = vmatpush1.xpose.msra.mxu0 0.0
      %721 = vmatprep.subr.mxu0 0.0
      %722 = vmatpush1.xpose.msra.mxu0 0.0
      %723 = vmatprep.subr.mxu0 0.0
      %724 = vmatpush1.xpose.msra.mxu0 0.0
      %725 = vmatprep.subr.mxu0 0.0
      %726 = vmatpush1.xpose.msra.mxu0 0.0
      %727 = vmatprep.subr.mxu0 0.0
      %728 = vmatpush1.xpose.msra.mxu0 0.0
      %729 = vmatprep.subr.mxu0 0.0
      %730 = vmatpush1.xpose.msra.mxu0 %v697
      %731 = vmatprep.subr.mxu0 0.0
      %732 = vmatpush2.xpose.msra.mxu0 0.0
      %733 = vmatprep.subr.mxu0 0.0
      %734 = vmatpush2.xpose.msra.mxu0 0.0
      %735 = vmatprep.subr.mxu0 0.0
      %736 = vmatpush2.xpose.msra.mxu0 0.0
      %737 = vmatprep.subr.mxu0 0.0
      %738 = vmatpush2.xpose.msra.mxu0 0.0
      %739 = vmatprep.subr.mxu0 0.0
      %740 = vmatpush2.xpose.msra.mxu0 0.0
      %741 = vmatprep.subr.mxu0 0.0
      %742 = vmatpush2.xpose.msra.mxu0 0.0
      %743 = vmatprep.subr.mxu0 0.0
      %744 = vmatpush2.xpose.msra.mxu0 0.0
      %745 = vmatprep.subr.mxu0 0.0
      %746 = vmatpush2.xpose.msra.mxu0 0.0
      %747 = vmatprep.subr.mxu0 0.0
      %748 = vmatpush2.xpose.msra.mxu0 0.0
      %749 = vmatprep.subr.mxu0 0.0
      %750 = vmatpush2.xpose.msra.mxu0 0.0
      %751 = vmatprep.subr.mxu0 0.0
      %752 = vmatpush2.xpose.msra.mxu0 0.0
      %753 = vmatprep.subr.mxu0 0.0
      %754 = vmatpush2.xpose.msra.mxu0 0.0
      %755 = vmatprep.subr.mxu0 0.0
      %756 = vmatpush2.xpose.msra.mxu0 0.0
      %757 = vmatprep.subr.mxu0 0.0
      %758 = vmatpush2.xpose.msra.mxu0 0.0
      %759 = vmatprep.subr.mxu0 0.0
      %760 = vmatpush2.xpose.msra.mxu0 0.0
      %761 = vmatprep.subr.mxu0 0.0
      %762 = vmatpush2.xpose.msra.mxu0 0.0
      %763 = vmatprep.mubr.f32.mxu0 0.0
      %764 = vmatmul.mubr.f32.gmra.mxu0 %v673
      %v765 = vpop.f32.mrf.mxu0
      %v766 = vadd.f32 0.0, %v765
      %v767 = vpop.f32.mrf.mxu0
      %768 = vmatprep.mubr.f32.mxu0 0.0
      %769 = vmatmul.mubr.f32.gmra.mxu0 %v676
      %v770 = vpop.f32.mrf.mxu0
      %v771 = vadd.f32 0.0, %v770
      %v772 = vpop.f32.mrf.mxu0
      %773 = vmatprep.mubr.f32.mxu0 0.0
      %774 = vmatmul.mubr.f32.gmra.mxu0 %v679
      %v775 = vpop.f32.mrf.mxu0
      %v776 = vadd.f32 0.0, %v775
      %v777 = vpop.f32.mrf.mxu0
      %778 = vmatprep.mubr.f32.mxu0 0.0
      %779 = vmatmul.mubr.f32.gmra.mxu0 %v682
      %v780 = vpop.f32.mrf.mxu0
      %v781 = vadd.f32 0.0, %v780
      %v782 = vpop.f32.mrf.mxu0
      %783 = vmatprep.mubr.f32.mxu0 0.0
      %784 = vmatmul.mubr.f32.gmra.mxu0 %v685
      %v785 = vpop.f32.mrf.mxu0
      %v786 = vadd.f32 0.0, %v785
      %v787 = vpop.f32.mrf.mxu0
      %788 = vmatprep.mubr.f32.mxu0 0.0
      %789 = vmatmul.mubr.f32.gmra.mxu0 %v688
      %v790 = vpop.f32.mrf.mxu0
      %v791 = vadd.f32 0.0, %v790
      %v792 = vpop.f32.mrf.mxu0
      %793 = vmatprep.mubr.f32.mxu0 0.0
      %794 = vmatmul.mubr.f32.gmra.mxu0 %v691
      %v795 = vpop.f32.mrf.mxu0
      %v796 = vadd.f32 0.0, %v795
      %v797 = vpop.f32.mrf.mxu0
      %798 = vmatprep.mubr.f32.mxu0 0.0
      %799 = vmatmul.mubr.f32.gmra.mxu0 %v694
      %v800 = vpop.f32.mrf.mxu0
      %v801 = vadd.f32 0.0, %v800
      %v802 = vpop.f32.mrf.mxu0
      %803 = vdwg.mxu0
      %v804 = vld [vmem:[%s7] sm:$0xff]
      %v805 = vld [vmem:[%s7 + $0x8] sm:$0xff]
      %v806 = vld [vmem:[%s7 + $0x10] sm:$0xff]
      %v807 = vld [vmem:[%s7 + $0x18] sm:$0xff]
      %v808 = vld [vmem:[%s7 + $0x20] sm:$0xff]
      %v809 = vld [vmem:[%s7 + $0x28] sm:$0xff]
      %v810 = vld [vmem:[%s7 + $0x30] sm:$0xff]
      %v811 = vld [vmem:[%s7 + $0x38] sm:$0xff]
      %v812 = vld [vmem:[%s8] sm:$0xff]
      %v813 = vld [vmem:[%s8 + $0x8] sm:$0xff]
      %v814 = vld [vmem:[%s8 + $0x10] sm:$0xff]
      %v815 = vld [vmem:[%s8 + $0x18] sm:$0xff]
      %v816 = vld [vmem:[%s8 + $0x20] sm:$0xff]
      %v817 = vld [vmem:[%s8 + $0x28] sm:$0xff]
      %v818 = vld [vmem:[%s8 + $0x30] sm:$0xff]
      %v819 = vld [vmem:[%s8 + $0x38] sm:$0xff]
      %v820 = vlaneseq
      %v821 = vand.u32 %v820, 127
      %v822 = vand.u32 %v821, 1
      %vm823 = vcmp.eq.s32.totalorder %v822, 0
      %832 = vrot.lane.b32.xlu0 %v484, 127
      %v833 = vpop.permute.xlu0 %832
      %834 = vrot.lane.b32.xlu0 %v489, 127
      %v835 = vpop.permute.xlu0 %834
      %836 = vrot.lane.b32.xlu0 %v494, 127
      %v837 = vpop.permute.xlu0 %836
      %838 = vrot.lane.b32.xlu0 %v499, 127
      %v839 = vpop.permute.xlu0 %838
      %840 = vrot.lane.b32.xlu0 %v504, 127
      %v841 = vpop.permute.xlu0 %840
      %842 = vrot.lane.b32.xlu0 %v509, 127
      %v843 = vpop.permute.xlu0 %842
      %844 = vrot.lane.b32.xlu0 %v514, 127
      %v845 = vpop.permute.xlu0 %844
      %846 = vrot.lane.b32.xlu0 %v519, 127
      %v847 = vpop.permute.xlu0 %846
      %856 = vrot.lane.b32.xlu0 %v484, 7
      %v857 = vpop.permute.xlu0 %856
      %858 = vrot.lane.b32.xlu0 %v489, 7
      %v859 = vpop.permute.xlu0 %858
      %860 = vrot.lane.b32.xlu0 %v494, 7
      %v861 = vpop.permute.xlu0 %860
      %862 = vrot.lane.b32.xlu0 %v499, 7
      %v863 = vpop.permute.xlu0 %862
      %864 = vrot.lane.b32.xlu0 %v504, 7
      %v865 = vpop.permute.xlu0 %864
      %866 = vrot.lane.b32.xlu0 %v509, 7
      %v867 = vpop.permute.xlu0 %866
      %868 = vrot.lane.b32.xlu0 %v514, 7
      %v869 = vpop.permute.xlu0 %868
      %870 = vrot.lane.b32.xlu0 %v519, 7
      %v871 = vpop.permute.xlu0 %870
      %vm880 = vcmask 56320
      %v881 = vsel %vm880, %v833, %v857
      %v882 = vsel %vm880, %v835, %v859
      %v883 = vsel %vm880, %v837, %v861
      %v884 = vsel %vm880, %v839, %v863
      %v885 = vsel %vm880, %v841, %v865
      %v886 = vsel %vm880, %v843, %v867
      %v887 = vsel %vm880, %v845, %v869
      %v888 = vsel %vm880, %v847, %v871
      %889 = vrot.lane.b32.xlu0 %v484, 121
      %v890 = vpop.permute.xlu0 %889
      %891 = vrot.lane.b32.xlu0 %v489, 121
      %v892 = vpop.permute.xlu0 %891
      %893 = vrot.lane.b32.xlu0 %v494, 121
      %v894 = vpop.permute.xlu0 %893
      %895 = vrot.lane.b32.xlu0 %v499, 121
      %v896 = vpop.permute.xlu0 %895
      %897 = vrot.lane.b32.xlu0 %v504, 121
      %v898 = vpop.permute.xlu0 %897
      %899 = vrot.lane.b32.xlu0 %v509, 121
      %v900 = vpop.permute.xlu0 %899
      %901 = vrot.lane.b32.xlu0 %v514, 121
      %v902 = vpop.permute.xlu0 %901
      %903 = vrot.lane.b32.xlu0 %v519, 121
      %v904 = vpop.permute.xlu0 %903
      %913 = vrot.lane.b32.xlu0 %v484, 1
      %v914 = vpop.permute.xlu0 %913
      %915 = vrot.lane.b32.xlu0 %v489, 1
      %v916 = vpop.permute.xlu0 %915
      %917 = vrot.lane.b32.xlu0 %v494, 1
      %v918 = vpop.permute.xlu0 %917
      %919 = vrot.lane.b32.xlu0 %v499, 1
      %v920 = vpop.permute.xlu0 %919
      %921 = vrot.lane.b32.xlu0 %v504, 1
      %v922 = vpop.permute.xlu0 %921
      %923 = vrot.lane.b32.xlu0 %v509, 1
      %v924 = vpop.permute.xlu0 %923
      %925 = vrot.lane.b32.xlu0 %v514, 1
      %v926 = vpop.permute.xlu0 %925
      %927 = vrot.lane.b32.xlu0 %v519, 1
      %v928 = vpop.permute.xlu0 %927
      %vm937 = vcmask 7168
      %v938 = vsel %vm937, %v890, %v914
      %v939 = vsel %vm937, %v892, %v916
      %v940 = vsel %vm937, %v894, %v918
      %v941 = vsel %vm937, %v896, %v920
      %v942 = vsel %vm937, %v898, %v922
      %v943 = vsel %vm937, %v900, %v924
      %v944 = vsel %vm937, %v902, %v926
      %v945 = vsel %vm937, %v904, %v928
      %v946 = vmul.f32 %v484, %v804
      %v947 = vmul.f32 %v489, %v805
      %v948 = vmul.f32 %v494, %v806
      %v949 = vmul.f32 %v499, %v807
      %v950 = vmul.f32 %v504, %v808
      %v951 = vmul.f32 %v509, %v809
      %v952 = vmul.f32 %v514, %v810
      %v953 = vmul.f32 %v519, %v811
      %v954 = vsel %vm823, %v881, %v938
      %v955 = vsel %vm823, %v882, %v939
      %v956 = vsel %vm823, %v883, %v940
      %v957 = vsel %vm823, %v884, %v941
      %v958 = vsel %vm823, %v885, %v942
      %v959 = vsel %vm823, %v886, %v943
      %v960 = vsel %vm823, %v887, %v944
      %v961 = vsel %vm823, %v888, %v945
      %v962 = vmul.f32 %v954, %v812
      %v963 = vmul.f32 %v955, %v813
      %v964 = vmul.f32 %v956, %v814
      %v965 = vmul.f32 %v957, %v815
      %v966 = vmul.f32 %v958, %v816
      %v967 = vmul.f32 %v959, %v817
      %v968 = vmul.f32 %v960, %v818
      %v969 = vmul.f32 %v961, %v819
      %v970 = vadd.f32 %v946, %v962
      %v971 = vadd.f32 %v947, %v963
      %v972 = vadd.f32 %v948, %v964
      %v973 = vadd.f32 %v949, %v965
      %v974 = vadd.f32 %v950, %v966
      %v975 = vadd.f32 %v951, %v967
      %v976 = vadd.f32 %v952, %v968
      %v977 = vadd.f32 %v953, %v969
      %v978 = vmul.f32 %v970, 0.5
      %v979 = vmul.f32 %v971, 0.5
      %v980 = vmul.f32 %v972, 0.5
      %v981 = vmul.f32 %v973, 0.5
      %v982 = vmul.f32 %v974, 0.5
      %v983 = vmul.f32 %v975, 0.5
      %v984 = vmul.f32 %v976, 0.5
      %v985 = vmul.f32 %v977, 0.5
      %994 = vrot.lane.b32.xlu0 %v625, 127
      %v995 = vpop.permute.xlu0 %994
      %996 = vrot.lane.b32.xlu0 %v630, 127
      %v997 = vpop.permute.xlu0 %996
      %998 = vrot.lane.b32.xlu0 %v635, 127
      %v999 = vpop.permute.xlu0 %998
      %1000 = vrot.lane.b32.xlu0 %v640, 127
      %v1001 = vpop.permute.xlu0 %1000
      %1002 = vrot.lane.b32.xlu0 %v645, 127
      %v1003 = vpop.permute.xlu0 %1002
      %1004 = vrot.lane.b32.xlu0 %v650, 127
      %v1005 = vpop.permute.xlu0 %1004
      %1006 = vrot.lane.b32.xlu0 %v655, 127
      %v1007 = vpop.permute.xlu0 %1006
      %1008 = vrot.lane.b32.xlu0 %v660, 127
      %v1009 = vpop.permute.xlu0 %1008
      %1018 = vrot.lane.b32.xlu0 %v625, 7
      %v1019 = vpop.permute.xlu0 %1018
      %1020 = vrot.lane.b32.xlu0 %v630, 7
      %v1021 = vpop.permute.xlu0 %1020
      %1022 = vrot.lane.b32.xlu0 %v635, 7
      %v1023 = vpop.permute.xlu0 %1022
      %1024 = vrot.lane.b32.xlu0 %v640, 7
      %v1025 = vpop.permute.xlu0 %1024
      %1026 = vrot.lane.b32.xlu0 %v645, 7
      %v1027 = vpop.permute.xlu0 %1026
      %1028 = vrot.lane.b32.xlu0 %v650, 7
      %v1029 = vpop.permute.xlu0 %1028
      %1030 = vrot.lane.b32.xlu0 %v655, 7
      %v1031 = vpop.permute.xlu0 %1030
      %1032 = vrot.lane.b32.xlu0 %v660, 7
      %v1033 = vpop.permute.xlu0 %1032
      %v1042 = vsel %vm880, %v995, %v1019
      %v1043 = vsel %vm880, %v997, %v1021
      %v1044 = vsel %vm880, %v999, %v1023
      %v1045 = vsel %vm880, %v1001, %v1025
      %v1046 = vsel %vm880, %v1003, %v1027
      %v1047 = vsel %vm880, %v1005, %v1029
      %v1048 = vsel %vm880, %v1007, %v1031
      %v1049 = vsel %vm880, %v1009, %v1033
      %1050 = vrot.lane.b32.xlu0 %v625, 121
      %v1051 = vpop.permute.xlu0 %1050
      %1052 = vrot.lane.b32.xlu0 %v630, 121
      %v1053 = vpop.permute.xlu0 %1052
      %1054 = vrot.lane.b32.xlu0 %v635, 121
      %v1055 = vpop.permute.xlu0 %1054
      %1056 = vrot.lane.b32.xlu0 %v640, 121
      %v1057 = vpop.permute.xlu0 %1056
      %1058 = vrot.lane.b32.xlu0 %v645, 121
      %v1059 = vpop.permute.xlu0 %1058
      %1060 = vrot.lane.b32.xlu0 %v650, 121
      %v1061 = vpop.permute.xlu0 %1060
      %1062 = vrot.lane.b32.xlu0 %v655, 121
      %v1063 = vpop.permute.xlu0 %1062
      %1064 = vrot.lane.b32.xlu0 %v660, 121
      %v1065 = vpop.permute.xlu0 %1064
      %1074 = vrot.lane.b32.xlu0 %v625, 1
      %v1075 = vpop.permute.xlu0 %1074
      %1076 = vrot.lane.b32.xlu0 %v630, 1
      %v1077 = vpop.permute.xlu0 %1076
      %1078 = vrot.lane.b32.xlu0 %v635, 1
      %v1079 = vpop.permute.xlu0 %1078
      %1080 = vrot.lane.b32.xlu0 %v640, 1
      %v1081 = vpop.permute.xlu0 %1080
      %1082 = vrot.lane.b32.xlu0 %v645, 1
      %v1083 = vpop.permute.xlu0 %1082
      %1084 = vrot.lane.b32.xlu0 %v650, 1
      %v1085 = vpop.permute.xlu0 %1084
      %1086 = vrot.lane.b32.xlu0 %v655, 1
      %v1087 = vpop.permute.xlu0 %1086
      %1088 = vrot.lane.b32.xlu0 %v660, 1
      %v1089 = vpop.permute.xlu0 %1088
      %v1098 = vsel %vm937, %v1051, %v1075
      %v1099 = vsel %vm937, %v1053, %v1077
      %v1100 = vsel %vm937, %v1055, %v1079
      %v1101 = vsel %vm937, %v1057, %v1081
      %v1102 = vsel %vm937, %v1059, %v1083
      %v1103 = vsel %vm937, %v1061, %v1085
      %v1104 = vsel %vm937, %v1063, %v1087
      %v1105 = vsel %vm937, %v1065, %v1089
      %v1106 = vmul.f32 %v625, %v804
      %v1107 = vmul.f32 %v630, %v805
      %v1108 = vmul.f32 %v635, %v806
      %v1109 = vmul.f32 %v640, %v807
      %v1110 = vmul.f32 %v645, %v808
      %v1111 = vmul.f32 %v650, %v809
      %v1112 = vmul.f32 %v655, %v810
      %v1113 = vmul.f32 %v660, %v811
      %v1114 = vsel %vm823, %v1042, %v1098
      %v1115 = vsel %vm823, %v1043, %v1099
      %v1116 = vsel %vm823, %v1044, %v1100
      %v1117 = vsel %vm823, %v1045, %v1101
      %v1118 = vsel %vm823, %v1046, %v1102
      %v1119 = vsel %vm823, %v1047, %v1103
      %v1120 = vsel %vm823, %v1048, %v1104
      %v1121 = vsel %vm823, %v1049, %v1105
      %v1122 = vmul.f32 %v1114, %v812
      %v1123 = vmul.f32 %v1115, %v813
      %v1124 = vmul.f32 %v1116, %v814
      %v1125 = vmul.f32 %v1117, %v815
      %v1126 = vmul.f32 %v1118, %v816
      %v1127 = vmul.f32 %v1119, %v817
      %v1128 = vmul.f32 %v1120, %v818
      %v1129 = vmul.f32 %v1121, %v819
      %v1130 = vadd.f32 %v1106, %v1122
      %v1131 = vadd.f32 %v1107, %v1123
      %v1132 = vadd.f32 %v1108, %v1124
      %v1133 = vadd.f32 %v1109, %v1125
      %v1134 = vadd.f32 %v1110, %v1126
      %v1135 = vadd.f32 %v1111, %v1127
      %v1136 = vadd.f32 %v1112, %v1128
      %v1137 = vadd.f32 %v1113, %v1129
      %vm1138 = vcmask 31744
      %v1140 = vsel %vm1138, %v978, 0
      %v1143 = vsel %vm1138, %v979, 0
      %v1146 = vsel %vm1138, %v980, 0
      %v1149 = vsel %vm1138, %v981, 0
      %v1152 = vsel %vm1138, %v982, 0
      %v1155 = vsel %vm1138, %v983, 0
      %v1158 = vsel %vm1138, %v984, 0
      %v1161 = vsel %vm1138, %v985, 0
      %v1164 = vsel %vm1138, %v1130, 0
      %v1167 = vsel %vm1138, %v1131, 0
      %v1170 = vsel %vm1138, %v1132, 0
      %v1173 = vsel %vm1138, %v1133, 0
      %v1176 = vsel %vm1138, %v1134, 0
      %v1179 = vsel %vm1138, %v1135, 0
      %v1182 = vsel %vm1138, %v1136, 0
      %v1185 = vsel %vm1138, %v1137, 0
      %1187 = vmatprep.subr.mxu0 0.0
      %1188 = vmatpush1.xpose.msra.mxu0 0.0
      %1189 = vmatprep.subr.mxu0 0.0
      %1190 = vmatpush1.xpose.msra.mxu0 0.0
      %1191 = vmatprep.subr.mxu0 0.0
      %1192 = vmatpush1.xpose.msra.mxu0 0.0
      %1193 = vmatprep.subr.mxu0 0.0
      %1194 = vmatpush1.xpose.msra.mxu0 0.0
      %1195 = vmatprep.subr.mxu0 0.0
      %1196 = vmatpush1.xpose.msra.mxu0 0.0
      %1197 = vmatprep.subr.mxu0 0.0
      %1198 = vmatpush1.xpose.msra.mxu0 0.0
      %1199 = vmatprep.subr.mxu0 0.0
      %1200 = vmatpush1.xpose.msra.mxu0 0.0
      %1201 = vmatprep.subr.mxu0 0.0
      %1202 = vmatpush1.xpose.msra.mxu0 0.0
      %1203 = vmatprep.subr.mxu0 0.0
      %1204 = vmatpush1.xpose.msra.mxu0 %v1185
      %1205 = vmatprep.subr.mxu0 0.0
      %1206 = vmatpush1.xpose.msra.mxu0 %v1182
      %1207 = vmatprep.subr.mxu0 0.0
      %1208 = vmatpush1.xpose.msra.mxu0 %v1179
      %1209 = vmatprep.subr.mxu0 0.0
      %1210 = vmatpush1.xpose.msra.mxu0 %v1176
      %1211 = vmatprep.subr.mxu0 0.0
      %1212 = vmatpush1.xpose.msra.mxu0 %v1173
      %1213 = vmatprep.subr.mxu0 0.0
      %1214 = vmatpush1.xpose.msra.mxu0 %v1170
      %1215 = vmatprep.subr.mxu0 0.0
      %1216 = vmatpush1.xpose.msra.mxu0 %v1167
      %1217 = vmatprep.subr.mxu0 0.0
      %1218 = vmatpush1.xpose.msra.mxu0 %v1164
      %1219 = vmatprep.subr.mxu0 0.0
      %1220 = vmatpush2.xpose.msra.mxu0 0.0
      %1221 = vmatprep.subr.mxu0 0.0
      %1222 = vmatpush2.xpose.msra.mxu0 0.0
      %1223 = vmatprep.subr.mxu0 0.0
      %1224 = vmatpush2.xpose.msra.mxu0 0.0
      %1225 = vmatprep.subr.mxu0 0.0
      %1226 = vmatpush2.xpose.msra.mxu0 0.0
      %1227 = vmatprep.subr.mxu0 0.0
      %1228 = vmatpush2.xpose.msra.mxu0 0.0
      %1229 = vmatprep.subr.mxu0 0.0
      %1230 = vmatpush2.xpose.msra.mxu0 0.0
      %1231 = vmatprep.subr.mxu0 0.0
      %1232 = vmatpush2.xpose.msra.mxu0 0.0
      %1233 = vmatprep.subr.mxu0 0.0
      %1234 = vmatpush2.xpose.msra.mxu0 0.0
      %1235 = vmatprep.subr.mxu0 0.0
      %1236 = vmatpush2.xpose.msra.mxu0 0.0
      %1237 = vmatprep.subr.mxu0 0.0
      %1238 = vmatpush2.xpose.msra.mxu0 0.0
      %1239 = vmatprep.subr.mxu0 0.0
      %1240 = vmatpush2.xpose.msra.mxu0 0.0
      %1241 = vmatprep.subr.mxu0 0.0
      %1242 = vmatpush2.xpose.msra.mxu0 0.0
      %1243 = vmatprep.subr.mxu0 0.0
      %1244 = vmatpush2.xpose.msra.mxu0 0.0
      %1245 = vmatprep.subr.mxu0 0.0
      %1246 = vmatpush2.xpose.msra.mxu0 0.0
      %1247 = vmatprep.subr.mxu0 0.0
      %1248 = vmatpush2.xpose.msra.mxu0 0.0
      %1249 = vmatprep.subr.mxu0 0.0
      %1250 = vmatpush2.xpose.msra.mxu0 0.0
      %1251 = vmatprep.mubr.f32.mxu0 0.0
      %1252 = vmatmul.mubr.f32.gmra.mxu0 %v1140
      %v1253 = vpop.f32.mrf.mxu0
      %v1254 = vadd.f32 0.0, %v1253
      %v1255 = vpop.f32.mrf.mxu0
      %1256 = vmatprep.mubr.f32.mxu0 0.0
      %1257 = vmatmul.mubr.f32.gmra.mxu0 %v1143
      %v1258 = vpop.f32.mrf.mxu0
      %v1259 = vadd.f32 0.0, %v1258
      %v1260 = vpop.f32.mrf.mxu0
      %1261 = vmatprep.mubr.f32.mxu0 0.0
      %1262 = vmatmul.mubr.f32.gmra.mxu0 %v1146
      %v1263 = vpop.f32.mrf.mxu0
      %v1264 = vadd.f32 0.0, %v1263
      %v1265 = vpop.f32.mrf.mxu0
      %1266 = vmatprep.mubr.f32.mxu0 0.0
      %1267 = vmatmul.mubr.f32.gmra.mxu0 %v1149
      %v1268 = vpop.f32.mrf.mxu0
      %v1269 = vadd.f32 0.0, %v1268
      %v1270 = vpop.f32.mrf.mxu0
      %1271 = vmatprep.mubr.f32.mxu0 0.0
      %1272 = vmatmul.mubr.f32.gmra.mxu0 %v1152
      %v1273 = vpop.f32.mrf.mxu0
      %v1274 = vadd.f32 0.0, %v1273
      %v1275 = vpop.f32.mrf.mxu0
      %1276 = vmatprep.mubr.f32.mxu0 0.0
      %1277 = vmatmul.mubr.f32.gmra.mxu0 %v1155
      %v1278 = vpop.f32.mrf.mxu0
      %v1279 = vadd.f32 0.0, %v1278
      %v1280 = vpop.f32.mrf.mxu0
      %1281 = vmatprep.mubr.f32.mxu0 0.0
      %1282 = vmatmul.mubr.f32.gmra.mxu0 %v1158
      %v1283 = vpop.f32.mrf.mxu0
      %v1284 = vadd.f32 0.0, %v1283
      %v1285 = vpop.f32.mrf.mxu0
      %1286 = vmatprep.mubr.f32.mxu0 0.0
      %1287 = vmatmul.mubr.f32.gmra.mxu0 %v1161
      %v1288 = vpop.f32.mrf.mxu0
      %v1289 = vadd.f32 0.0, %v1288
      %v1290 = vpop.f32.mrf.mxu0
      %1291 = vdwg.mxu0
      %vm1292 = vcmask 523264
      %v1293 = vsel %vm1292, %v1254, -inf
      %1294 = vmax.xlane.f32.xlu0 %v1293
      %v1295 = vpop.xlane.xlu0 %1294
      %v1296 = vsel %vm1292, %v1259, -inf
      %1297 = vmax.xlane.f32.xlu0 %v1296
      %v1298 = vpop.xlane.xlu0 %1297
      %v1299 = vsel %vm1292, %v1264, -inf
      %1300 = vmax.xlane.f32.xlu0 %v1299
      %v1301 = vpop.xlane.xlu0 %1300
      %v1302 = vsel %vm1292, %v1269, -inf
      %1303 = vmax.xlane.f32.xlu0 %v1302
      %v1304 = vpop.xlane.xlu0 %1303
      %v1305 = vsel %vm1292, %v1274, -inf
      %1306 = vmax.xlane.f32.xlu0 %v1305
      %v1307 = vpop.xlane.xlu0 %1306
      %v1308 = vsel %vm1292, %v1279, -inf
      %1309 = vmax.xlane.f32.xlu0 %v1308
      %v1310 = vpop.xlane.xlu0 %1309
      %v1311 = vsel %vm1292, %v1284, -inf
      %1312 = vmax.xlane.f32.xlu0 %v1311
      %v1313 = vpop.xlane.xlu0 %1312
      %v1314 = vsel %vm1292, %v1289, -inf
      %1315 = vmax.xlane.f32.xlu0 %v1314
      %v1316 = vpop.xlane.xlu0 %1315
      %v1317 = vsub.f32 %v1254, %v1295
      %v1318 = vsub.f32 %v1259, %v1298
      %v1319 = vsub.f32 %v1264, %v1301
      %v1320 = vsub.f32 %v1269, %v1304
      %v1321 = vsub.f32 %v1274, %v1307
      %v1322 = vsub.f32 %v1279, %v1310
      %v1323 = vsub.f32 %v1284, %v1313
      %v1324 = vsub.f32 %v1289, %v1316
      %v1325 = vmul.f32 %v1317, 1.442695
      %v1326 = vpow.pop %v1325
      %v1327 = vmul.f32 %v1318, 1.442695
      %v1328 = vpow.pop %v1327
      %v1329 = vmul.f32 %v1319, 1.442695
      %v1330 = vpow.pop %v1329
      %v1331 = vmul.f32 %v1320, 1.442695
      %v1332 = vpow.pop %v1331
      %v1333 = vmul.f32 %v1321, 1.442695
      %v1334 = vpow.pop %v1333
      %v1335 = vmul.f32 %v1322, 1.442695
      %v1336 = vpow.pop %v1335
      %v1337 = vmul.f32 %v1323, 1.442695
      %v1338 = vpow.pop %v1337
      %v1339 = vmul.f32 %v1324, 1.442695
      %v1340 = vpow.pop %v1339
      %v1341 = vsel %vm1292, %v1326, 0.0
      %1342 = vadd.xlane.f32.xlu0 %v1341
      %v1343 = vpop.xlane.xlu0 %1342
      %v1344 = vsel %vm1292, %v1328, 0.0
      %1345 = vadd.xlane.f32.xlu0 %v1344
      %v1346 = vpop.xlane.xlu0 %1345
      %v1347 = vsel %vm1292, %v1330, 0.0
      %1348 = vadd.xlane.f32.xlu0 %v1347
      %v1349 = vpop.xlane.xlu0 %1348
      %v1350 = vsel %vm1292, %v1332, 0.0
      %1351 = vadd.xlane.f32.xlu0 %v1350
      %v1352 = vpop.xlane.xlu0 %1351
      %v1353 = vsel %vm1292, %v1334, 0.0
      %1354 = vadd.xlane.f32.xlu0 %v1353
      %v1355 = vpop.xlane.xlu0 %1354
      %v1356 = vsel %vm1292, %v1336, 0.0
      %1357 = vadd.xlane.f32.xlu0 %v1356
      %v1358 = vpop.xlane.xlu0 %1357
      %v1359 = vsel %vm1292, %v1338, 0.0
      %1360 = vadd.xlane.f32.xlu0 %v1359
      %v1361 = vpop.xlane.xlu0 %1360
      %v1362 = vsel %vm1292, %v1340, 0.0
      %1363 = vadd.xlane.f32.xlu0 %v1362
      %v1364 = vpop.xlane.xlu0 %1363
      %v1365 = vrcp.pop %v1343
      %v1366 = vmul.f32 1.0, %v1365
      %v1367 = vrcp.pop %v1346
      %v1368 = vmul.f32 1.0, %v1367
      %v1369 = vrcp.pop %v1349
      %v1370 = vmul.f32 1.0, %v1369
      %v1371 = vrcp.pop %v1352
      %v1372 = vmul.f32 1.0, %v1371
      %v1373 = vrcp.pop %v1355
      %v1374 = vmul.f32 1.0, %v1373
      %v1375 = vrcp.pop %v1358
      %v1376 = vmul.f32 1.0, %v1375
      %v1377 = vrcp.pop %v1361
      %v1378 = vmul.f32 1.0, %v1377
      %v1379 = vrcp.pop %v1364
      %v1380 = vmul.f32 1.0, %v1379
      %v1382 = vsel %vm1292, %v1326, 0
      %v1385 = vsel %vm1292, %v1328, 0
      %v1388 = vsel %vm1292, %v1330, 0
      %v1391 = vsel %vm1292, %v1332, 0
      %v1394 = vsel %vm1292, %v1334, 0
      %v1397 = vsel %vm1292, %v1336, 0
      %v1400 = vsel %vm1292, %v1338, 0
      %v1403 = vsel %vm1292, %v1340, 0
      %1405 = vmatprep.subr.mxu0 0.0
      %1406 = vmatpush1.msra.mxu0 0.0
      %1407 = vmatprep.subr.mxu0 0.0
      %1408 = vmatpush1.msra.mxu0 0.0
      %1409 = vmatprep.subr.mxu0 0.0
      %1410 = vmatpush1.msra.mxu0 0.0
      %1411 = vmatprep.subr.mxu0 0.0
      %1412 = vmatpush1.msra.mxu0 0.0
      %1413 = vmatprep.subr.mxu0 0.0
      %1414 = vmatpush1.msra.mxu0 0.0
      %1415 = vmatprep.subr.mxu0 0.0
      %1416 = vmatpush1.msra.mxu0 0.0
      %1417 = vmatprep.subr.mxu0 0.0
      %1418 = vmatpush1.msra.mxu0 0.0
      %1419 = vmatprep.subr.mxu0 0.0
      %1420 = vmatpush1.msra.mxu0 0.0
      %1421 = vmatprep.subr.mxu0 0.0
      %1422 = vmatpush1.msra.mxu0 %v801
      %1423 = vmatprep.subr.mxu0 0.0
      %1424 = vmatpush1.msra.mxu0 %v796
      %1425 = vmatprep.subr.mxu0 0.0
      %1426 = vmatpush1.msra.mxu0 %v791
      %1427 = vmatprep.subr.mxu0 0.0
      %1428 = vmatpush1.msra.mxu0 %v786
      %1429 = vmatprep.subr.mxu0 0.0
      %1430 = vmatpush1.msra.mxu0 %v781
      %1431 = vmatprep.subr.mxu0 0.0
      %1432 = vmatpush1.msra.mxu0 %v776
      %1433 = vmatprep.subr.mxu0 0.0
      %1434 = vmatpush1.msra.mxu0 %v771
      %1435 = vmatprep.subr.mxu0 0.0
      %1436 = vmatpush1.msra.mxu0 %v766
      %1437 = vmatprep.subr.mxu0 0.0
      %1438 = vmatpush2.msra.mxu0 0.0
      %1439 = vmatprep.subr.mxu0 0.0
      %1440 = vmatpush2.msra.mxu0 0.0
      %1441 = vmatprep.subr.mxu0 0.0
      %1442 = vmatpush2.msra.mxu0 0.0
      %1443 = vmatprep.subr.mxu0 0.0
      %1444 = vmatpush2.msra.mxu0 0.0
      %1445 = vmatprep.subr.mxu0 0.0
      %1446 = vmatpush2.msra.mxu0 0.0
      %1447 = vmatprep.subr.mxu0 0.0
      %1448 = vmatpush2.msra.mxu0 0.0
      %1449 = vmatprep.subr.mxu0 0.0
      %1450 = vmatpush2.msra.mxu0 0.0
      %1451 = vmatprep.subr.mxu0 0.0
      %1452 = vmatpush2.msra.mxu0 0.0
      %1453 = vmatprep.subr.mxu0 0.0
      %1454 = vmatpush2.msra.mxu0 0.0
      %1455 = vmatprep.subr.mxu0 0.0
      %1456 = vmatpush2.msra.mxu0 0.0
      %1457 = vmatprep.subr.mxu0 0.0
      %1458 = vmatpush2.msra.mxu0 0.0
      %1459 = vmatprep.subr.mxu0 0.0
      %1460 = vmatpush2.msra.mxu0 0.0
      %1461 = vmatprep.subr.mxu0 0.0
      %1462 = vmatpush2.msra.mxu0 0.0
      %1463 = vmatprep.subr.mxu0 0.0
      %1464 = vmatpush2.msra.mxu0 0.0
      %1465 = vmatprep.subr.mxu0 0.0
      %1466 = vmatpush2.msra.mxu0 0.0
      %1467 = vmatprep.subr.mxu0 0.0
      %1468 = vmatpush2.msra.mxu0 0.0
      %1469 = vmatprep.mubr.f32.mxu0 0.0
      %1470 = vmatmul.mubr.f32.gmra.mxu0 %v1382
      %v1471 = vpop.f32.mrf.mxu0
      %v1472 = vadd.f32 0.0, %v1471
      %v1473 = vpop.f32.mrf.mxu0
      %1474 = vmatprep.mubr.f32.mxu0 0.0
      %1475 = vmatmul.mubr.f32.gmra.mxu0 %v1385
      %v1476 = vpop.f32.mrf.mxu0
      %v1477 = vadd.f32 0.0, %v1476
      %v1478 = vpop.f32.mrf.mxu0
      %1479 = vmatprep.mubr.f32.mxu0 0.0
      %1480 = vmatmul.mubr.f32.gmra.mxu0 %v1388
      %v1481 = vpop.f32.mrf.mxu0
      %v1482 = vadd.f32 0.0, %v1481
      %v1483 = vpop.f32.mrf.mxu0
      %1484 = vmatprep.mubr.f32.mxu0 0.0
      %1485 = vmatmul.mubr.f32.gmra.mxu0 %v1391
      %v1486 = vpop.f32.mrf.mxu0
      %v1487 = vadd.f32 0.0, %v1486
      %v1488 = vpop.f32.mrf.mxu0
      %1489 = vmatprep.mubr.f32.mxu0 0.0
      %1490 = vmatmul.mubr.f32.gmra.mxu0 %v1394
      %v1491 = vpop.f32.mrf.mxu0
      %v1492 = vadd.f32 0.0, %v1491
      %v1493 = vpop.f32.mrf.mxu0
      %1494 = vmatprep.mubr.f32.mxu0 0.0
      %1495 = vmatmul.mubr.f32.gmra.mxu0 %v1397
      %v1496 = vpop.f32.mrf.mxu0
      %v1497 = vadd.f32 0.0, %v1496
      %v1498 = vpop.f32.mrf.mxu0
      %1499 = vmatprep.mubr.f32.mxu0 0.0
      %1500 = vmatmul.mubr.f32.gmra.mxu0 %v1400
      %v1501 = vpop.f32.mrf.mxu0
      %v1502 = vadd.f32 0.0, %v1501
      %v1503 = vpop.f32.mrf.mxu0
      %1504 = vmatprep.mubr.f32.mxu0 0.0
      %1505 = vmatmul.mubr.f32.gmra.mxu0 %v1403
      %v1506 = vpop.f32.mrf.mxu0
      %v1507 = vadd.f32 0.0, %v1506
      %v1508 = vpop.f32.mrf.mxu0
      %1509 = vdwg.mxu0
      %v1510 = vmul.f32 %v1472, %v1366
      %v1511 = vmul.f32 %v1477, %v1368
      %v1512 = vmul.f32 %v1482, %v1370
      %v1513 = vmul.f32 %v1487, %v1372
      %v1514 = vmul.f32 %v1492, %v1374
      %v1515 = vmul.f32 %v1497, %v1376
      %v1516 = vmul.f32 %v1502, %v1378
      %v1517 = vmul.f32 %v1507, %v1380
      %1518 = vrot.lane.b32.xlu0 %v978, 124
      %v1519 = vpop.permute.xlu0 %1518
      %1520 = vrot.lane.b32.xlu0 %v979, 124
      %v1521 = vpop.permute.xlu0 %1520
      %1522 = vrot.lane.b32.xlu0 %v980, 124
      %v1523 = vpop.permute.xlu0 %1522
      %1524 = vrot.lane.b32.xlu0 %v981, 124
      %v1525 = vpop.permute.xlu0 %1524
      %1526 = vrot.lane.b32.xlu0 %v982, 124
      %v1527 = vpop.permute.xlu0 %1526
      %1528 = vrot.lane.b32.xlu0 %v983, 124
      %v1529 = vpop.permute.xlu0 %1528
      %1530 = vrot.lane.b32.xlu0 %v984, 124
      %v1531 = vpop.permute.xlu0 %1530
      %1532 = vrot.lane.b32.xlu0 %v985, 124
      %v1533 = vpop.permute.xlu0 %1532
      %1534 = vrot.lane.b32.xlu0 %v1130, 124
      %v1535 = vpop.permute.xlu0 %1534
      %1536 = vrot.lane.b32.xlu0 %v1131, 124
      %v1537 = vpop.permute.xlu0 %1536
      %1538 = vrot.lane.b32.xlu0 %v1132, 124
      %v1539 = vpop.permute.xlu0 %1538
      %1540 = vrot.lane.b32.xlu0 %v1133, 124
      %v1541 = vpop.permute.xlu0 %1540
      %1542 = vrot.lane.b32.xlu0 %v1134, 124
      %v1543 = vpop.permute.xlu0 %1542
      %1544 = vrot.lane.b32.xlu0 %v1135, 124
      %v1545 = vpop.permute.xlu0 %1544
      %1546 = vrot.lane.b32.xlu0 %v1136, 124
      %v1547 = vpop.permute.xlu0 %1546
      %1548 = vrot.lane.b32.xlu0 %v1137, 124
      %v1549 = vpop.permute.xlu0 %1548
      %v1550 = vsel %vm1138, %v1519, 0
      %v1552 = vsel %vm1138, %v1521, 0
      %v1554 = vsel %vm1138, %v1523, 0
      %v1556 = vsel %vm1138, %v1525, 0
      %v1558 = vsel %vm1138, %v1527, 0
      %v1560 = vsel %vm1138, %v1529, 0
      %v1562 = vsel %vm1138, %v1531, 0
      %v1564 = vsel %vm1138, %v1533, 0
      %v1566 = vsel %vm1138, %v1535, 0
      %v1568 = vsel %vm1138, %v1537, 0
      %v1570 = vsel %vm1138, %v1539, 0
      %v1572 = vsel %vm1138, %v1541, 0
      %v1574 = vsel %vm1138, %v1543, 0
      %v1576 = vsel %vm1138, %v1545, 0
      %v1578 = vsel %vm1138, %v1547, 0
      %v1580 = vsel %vm1138, %v1549, 0
      %1582 = vmatprep.subr.mxu0 0.0
      %1583 = vmatpush1.xpose.msra.mxu0 0.0
      %1584 = vmatprep.subr.mxu0 0.0
      %1585 = vmatpush1.xpose.msra.mxu0 0.0
      %1586 = vmatprep.subr.mxu0 0.0
      %1587 = vmatpush1.xpose.msra.mxu0 0.0
      %1588 = vmatprep.subr.mxu0 0.0
      %1589 = vmatpush1.xpose.msra.mxu0 0.0
      %1590 = vmatprep.subr.mxu0 0.0
      %1591 = vmatpush1.xpose.msra.mxu0 0.0
      %1592 = vmatprep.subr.mxu0 0.0
      %1593 = vmatpush1.xpose.msra.mxu0 0.0
      %1594 = vmatprep.subr.mxu0 0.0
      %1595 = vmatpush1.xpose.msra.mxu0 0.0
      %1596 = vmatprep.subr.mxu0 0.0
      %1597 = vmatpush1.xpose.msra.mxu0 0.0
      %1598 = vmatprep.subr.mxu0 0.0
      %1599 = vmatpush1.xpose.msra.mxu0 %v1580
      %1600 = vmatprep.subr.mxu0 0.0
      %1601 = vmatpush1.xpose.msra.mxu0 %v1578
      %1602 = vmatprep.subr.mxu0 0.0
      %1603 = vmatpush1.xpose.msra.mxu0 %v1576
      %1604 = vmatprep.subr.mxu0 0.0
      %1605 = vmatpush1.xpose.msra.mxu0 %v1574
      %1606 = vmatprep.subr.mxu0 0.0
      %1607 = vmatpush1.xpose.msra.mxu0 %v1572
      %1608 = vmatprep.subr.mxu0 0.0
      %1609 = vmatpush1.xpose.msra.mxu0 %v1570
      %1610 = vmatprep.subr.mxu0 0.0
      %1611 = vmatpush1.xpose.msra.mxu0 %v1568
      %1612 = vmatprep.subr.mxu0 0.0
      %1613 = vmatpush1.xpose.msra.mxu0 %v1566
      %1614 = vmatprep.subr.mxu0 0.0
      %1615 = vmatpush2.xpose.msra.mxu0 0.0
      %1616 = vmatprep.subr.mxu0 0.0
      %1617 = vmatpush2.xpose.msra.mxu0 0.0
      %1618 = vmatprep.subr.mxu0 0.0
      %1619 = vmatpush2.xpose.msra.mxu0 0.0
      %1620 = vmatprep.subr.mxu0 0.0
      %1621 = vmatpush2.xpose.msra.mxu0 0.0
      %1622 = vmatprep.subr.mxu0 0.0
      %1623 = vmatpush2.xpose.msra.mxu0 0.0
      %1624 = vmatprep.subr.mxu0 0.0
      %1625 = vmatpush2.xpose.msra.mxu0 0.0
      %1626 = vmatprep.subr.mxu0 0.0
      %1627 = vmatpush2.xpose.msra.mxu0 0.0
      %1628 = vmatprep.subr.mxu0 0.0
      %1629 = vmatpush2.xpose.msra.mxu0 0.0
      %1630 = vmatprep.subr.mxu0 0.0
      %1631 = vmatpush2.xpose.msra.mxu0 0.0
      %1632 = vmatprep.subr.mxu0 0.0
      %1633 = vmatpush2.xpose.msra.mxu0 0.0
      %1634 = vmatprep.subr.mxu0 0.0
      %1635 = vmatpush2.xpose.msra.mxu0 0.0
      %1636 = vmatprep.subr.mxu0 0.0
      %1637 = vmatpush2.xpose.msra.mxu0 0.0
      %1638 = vmatprep.subr.mxu0 0.0
      %1639 = vmatpush2.xpose.msra.mxu0 0.0
      %1640 = vmatprep.subr.mxu0 0.0
      %1641 = vmatpush2.xpose.msra.mxu0 0.0
      %1642 = vmatprep.subr.mxu0 0.0
      %1643 = vmatpush2.xpose.msra.mxu0 0.0
      %1644 = vmatprep.subr.mxu0 0.0
      %1645 = vmatpush2.xpose.msra.mxu0 0.0
      %1646 = vmatprep.mubr.f32.mxu0 0.0
      %1647 = vmatmul.mubr.f32.gmra.mxu0 %v1550
      %v1648 = vpop.f32.mrf.mxu0
      %v1649 = vadd.f32 0.0, %v1648
      %v1650 = vpop.f32.mrf.mxu0
      %1651 = vmatprep.mubr.f32.mxu0 0.0
      %1652 = vmatmul.mubr.f32.gmra.mxu0 %v1552
      %v1653 = vpop.f32.mrf.mxu0
      %v1654 = vadd.f32 0.0, %v1653
      %v1655 = vpop.f32.mrf.mxu0
      %1656 = vmatprep.mubr.f32.mxu0 0.0
      %1657 = vmatmul.mubr.f32.gmra.mxu0 %v1554
      %v1658 = vpop.f32.mrf.mxu0
      %v1659 = vadd.f32 0.0, %v1658
      %v1660 = vpop.f32.mrf.mxu0
      %1661 = vmatprep.mubr.f32.mxu0 0.0
      %1662 = vmatmul.mubr.f32.gmra.mxu0 %v1556
      %v1663 = vpop.f32.mrf.mxu0
      %v1664 = vadd.f32 0.0, %v1663
      %v1665 = vpop.f32.mrf.mxu0
      %1666 = vmatprep.mubr.f32.mxu0 0.0
      %1667 = vmatmul.mubr.f32.gmra.mxu0 %v1558
      %v1668 = vpop.f32.mrf.mxu0
      %v1669 = vadd.f32 0.0, %v1668
      %v1670 = vpop.f32.mrf.mxu0
      %1671 = vmatprep.mubr.f32.mxu0 0.0
      %1672 = vmatmul.mubr.f32.gmra.mxu0 %v1560
      %v1673 = vpop.f32.mrf.mxu0
      %v1674 = vadd.f32 0.0, %v1673
      %v1675 = vpop.f32.mrf.mxu0
      %1676 = vmatprep.mubr.f32.mxu0 0.0
      %1677 = vmatmul.mubr.f32.gmra.mxu0 %v1562
      %v1678 = vpop.f32.mrf.mxu0
      %v1679 = vadd.f32 0.0, %v1678
      %v1680 = vpop.f32.mrf.mxu0
      %1681 = vmatprep.mubr.f32.mxu0 0.0
      %1682 = vmatmul.mubr.f32.gmra.mxu0 %v1564
      %v1683 = vpop.f32.mrf.mxu0
      %v1684 = vadd.f32 0.0, %v1683
      %v1685 = vpop.f32.mrf.mxu0
      %1686 = vdwg.mxu0
      %v1687 = vsel %vm1292, %v1649, -inf
      %1688 = vmax.xlane.f32.xlu0 %v1687
      %v1689 = vpop.xlane.xlu0 %1688
      %v1690 = vsel %vm1292, %v1654, -inf
      %1691 = vmax.xlane.f32.xlu0 %v1690
      %v1692 = vpop.xlane.xlu0 %1691
      %v1693 = vsel %vm1292, %v1659, -inf
      %1694 = vmax.xlane.f32.xlu0 %v1693
      %v1695 = vpop.xlane.xlu0 %1694
      %v1696 = vsel %vm1292, %v1664, -inf
      %1697 = vmax.xlane.f32.xlu0 %v1696
      %v1698 = vpop.xlane.xlu0 %1697
      %v1699 = vsel %vm1292, %v1669, -inf
      %1700 = vmax.xlane.f32.xlu0 %v1699
      %v1701 = vpop.xlane.xlu0 %1700
      %v1702 = vsel %vm1292, %v1674, -inf
      %1703 = vmax.xlane.f32.xlu0 %v1702
      %v1704 = vpop.xlane.xlu0 %1703
      %v1705 = vsel %vm1292, %v1679, -inf
      %1706 = vmax.xlane.f32.xlu0 %v1705
      %v1707 = vpop.xlane.xlu0 %1706
      %v1708 = vsel %vm1292, %v1684, -inf
      %1709 = vmax.xlane.f32.xlu0 %v1708
      %v1710 = vpop.xlane.xlu0 %1709
      %v1711 = vsub.f32 %v1649, %v1689
      %v1712 = vsub.f32 %v1654, %v1692
      %v1713 = vsub.f32 %v1659, %v1695
      %v1714 = vsub.f32 %v1664, %v1698
      %v1715 = vsub.f32 %v1669, %v1701
      %v1716 = vsub.f32 %v1674, %v1704
      %v1717 = vsub.f32 %v1679, %v1707
      %v1718 = vsub.f32 %v1684, %v1710
      %v1719 = vmul.f32 %v1711, 1.442695
      %v1720 = vpow.pop %v1719
      %v1721 = vmul.f32 %v1712, 1.442695
      %v1722 = vpow.pop %v1721
      %v1723 = vmul.f32 %v1713, 1.442695
      %v1724 = vpow.pop %v1723
      %v1725 = vmul.f32 %v1714, 1.442695
      %v1726 = vpow.pop %v1725
      %v1727 = vmul.f32 %v1715, 1.442695
      %v1728 = vpow.pop %v1727
      %v1729 = vmul.f32 %v1716, 1.442695
      %v1730 = vpow.pop %v1729
      %v1731 = vmul.f32 %v1717, 1.442695
      %v1732 = vpow.pop %v1731
      %v1733 = vmul.f32 %v1718, 1.442695
      %v1734 = vpow.pop %v1733
      %v1735 = vsel %vm1292, %v1720, 0.0
      %1736 = vadd.xlane.f32.xlu0 %v1735
      %v1737 = vpop.xlane.xlu0 %1736
      %v1738 = vsel %vm1292, %v1722, 0.0
      %1739 = vadd.xlane.f32.xlu0 %v1738
      %v1740 = vpop.xlane.xlu0 %1739
      %v1741 = vsel %vm1292, %v1724, 0.0
      %1742 = vadd.xlane.f32.xlu0 %v1741
      %v1743 = vpop.xlane.xlu0 %1742
      %v1744 = vsel %vm1292, %v1726, 0.0
      %1745 = vadd.xlane.f32.xlu0 %v1744
      %v1746 = vpop.xlane.xlu0 %1745
      %v1747 = vsel %vm1292, %v1728, 0.0
      %1748 = vadd.xlane.f32.xlu0 %v1747
      %v1749 = vpop.xlane.xlu0 %1748
      %v1750 = vsel %vm1292, %v1730, 0.0
      %1751 = vadd.xlane.f32.xlu0 %v1750
      %v1752 = vpop.xlane.xlu0 %1751
      %v1753 = vsel %vm1292, %v1732, 0.0
      %1754 = vadd.xlane.f32.xlu0 %v1753
      %v1755 = vpop.xlane.xlu0 %1754
      %v1756 = vsel %vm1292, %v1734, 0.0
      %1757 = vadd.xlane.f32.xlu0 %v1756
      %v1758 = vpop.xlane.xlu0 %1757
      %v1759 = vrcp.pop %v1737
      %v1760 = vmul.f32 1.0, %v1759
      %v1761 = vrcp.pop %v1740
      %v1762 = vmul.f32 1.0, %v1761
      %v1763 = vrcp.pop %v1743
      %v1764 = vmul.f32 1.0, %v1763
      %v1765 = vrcp.pop %v1746
      %v1766 = vmul.f32 1.0, %v1765
      %v1767 = vrcp.pop %v1749
      %v1768 = vmul.f32 1.0, %v1767
      %v1769 = vrcp.pop %v1752
      %v1770 = vmul.f32 1.0, %v1769
      %v1771 = vrcp.pop %v1755
      %v1772 = vmul.f32 1.0, %v1771
      %v1773 = vrcp.pop %v1758
      %v1774 = vmul.f32 1.0, %v1773
      %1783 = vrot.lane.b32.xlu0 %v766, 124
      %v1784 = vpop.permute.xlu0 %1783
      %1785 = vrot.lane.b32.xlu0 %v771, 124
      %v1786 = vpop.permute.xlu0 %1785
      %1787 = vrot.lane.b32.xlu0 %v776, 124
      %v1788 = vpop.permute.xlu0 %1787
      %1789 = vrot.lane.b32.xlu0 %v781, 124
      %v1790 = vpop.permute.xlu0 %1789
      %1791 = vrot.lane.b32.xlu0 %v786, 124
      %v1792 = vpop.permute.xlu0 %1791
      %1793 = vrot.lane.b32.xlu0 %v791, 124
      %v1794 = vpop.permute.xlu0 %1793
      %1795 = vrot.lane.b32.xlu0 %v796, 124
      %v1796 = vpop.permute.xlu0 %1795
      %1797 = vrot.lane.b32.xlu0 %v801, 124
      %v1798 = vpop.permute.xlu0 %1797
      %v1808 = vsel %vm1292, %v1720, 0
      %v1811 = vsel %vm1292, %v1722, 0
      %v1814 = vsel %vm1292, %v1724, 0
      %v1817 = vsel %vm1292, %v1726, 0
      %v1820 = vsel %vm1292, %v1728, 0
      %v1823 = vsel %vm1292, %v1730, 0
      %v1826 = vsel %vm1292, %v1732, 0
      %v1829 = vsel %vm1292, %v1734, 0
      %1831 = vmatprep.subr.mxu0 0.0
      %1832 = vmatpush1.msra.mxu0 0.0
      %1833 = vmatprep.subr.mxu0 0.0
      %1834 = vmatpush1.msra.mxu0 0.0
      %1835 = vmatprep.subr.mxu0 0.0
      %1836 = vmatpush1.msra.mxu0 0.0
      %1837 = vmatprep.subr.mxu0 0.0
      %1838 = vmatpush1.msra.mxu0 0.0
      %1839 = vmatprep.subr.mxu0 0.0
      %1840 = vmatpush1.msra.mxu0 0.0
      %1841 = vmatprep.subr.mxu0 0.0
      %1842 = vmatpush1.msra.mxu0 0.0
      %1843 = vmatprep.subr.mxu0 0.0
      %1844 = vmatpush1.msra.mxu0 0.0
      %1845 = vmatprep.subr.mxu0 0.0
      %1846 = vmatpush1.msra.mxu0 0.0
      %1847 = vmatprep.subr.mxu0 0.0
      %1848 = vmatpush1.msra.mxu0 %v1798
      %1849 = vmatprep.subr.mxu0 0.0
      %1850 = vmatpush1.msra.mxu0 %v1796
      %1851 = vmatprep.subr.mxu0 0.0
      %1852 = vmatpush1.msra.mxu0 %v1794
      %1853 = vmatprep.subr.mxu0 0.0
      %1854 = vmatpush1.msra.mxu0 %v1792
      %1855 = vmatprep.subr.mxu0 0.0
      %1856 = vmatpush1.msra.mxu0 %v1790
      %1857 = vmatprep.subr.mxu0 0.0
      %1858 = vmatpush1.msra.mxu0 %v1788
      %1859 = vmatprep.subr.mxu0 0.0
      %1860 = vmatpush1.msra.mxu0 %v1786
      %1861 = vmatprep.subr.mxu0 0.0
      %1862 = vmatpush1.msra.mxu0 %v1784
      %1863 = vmatprep.subr.mxu0 0.0
      %1864 = vmatpush2.msra.mxu0 0.0
      %1865 = vmatprep.subr.mxu0 0.0
      %1866 = vmatpush2.msra.mxu0 0.0
      %1867 = vmatprep.subr.mxu0 0.0
      %1868 = vmatpush2.msra.mxu0 0.0
      %1869 = vmatprep.subr.mxu0 0.0
      %1870 = vmatpush2.msra.mxu0 0.0
      %1871 = vmatprep.subr.mxu0 0.0
      %1872 = vmatpush2.msra.mxu0 0.0
      %1873 = vmatprep.subr.mxu0 0.0
      %1874 = vmatpush2.msra.mxu0 0.0
      %1875 = vmatprep.subr.mxu0 0.0
      %1876 = vmatpush2.msra.mxu0 0.0
      %1877 = vmatprep.subr.mxu0 0.0
      %1878 = vmatpush2.msra.mxu0 0.0
      %1879 = vmatprep.subr.mxu0 0.0
      %1880 = vmatpush2.msra.mxu0 0.0
      %1881 = vmatprep.subr.mxu0 0.0
      %1882 = vmatpush2.msra.mxu0 0.0
      %1883 = vmatprep.subr.mxu0 0.0
      %1884 = vmatpush2.msra.mxu0 0.0
      %1885 = vmatprep.subr.mxu0 0.0
      %1886 = vmatpush2.msra.mxu0 0.0
      %1887 = vmatprep.subr.mxu0 0.0
      %1888 = vmatpush2.msra.mxu0 0.0
      %1889 = vmatprep.subr.mxu0 0.0
      %1890 = vmatpush2.msra.mxu0 0.0
      %1891 = vmatprep.subr.mxu0 0.0
      %1892 = vmatpush2.msra.mxu0 0.0
      %1893 = vmatprep.subr.mxu0 0.0
      %1894 = vmatpush2.msra.mxu0 0.0
      %1895 = vmatprep.mubr.f32.mxu0 0.0
      %1896 = vmatmul.mubr.f32.gmra.mxu0 %v1808
      %v1897 = vpop.f32.mrf.mxu0
      %v1898 = vadd.f32 0.0, %v1897
      %v1899 = vpop.f32.mrf.mxu0
      %1900 = vmatprep.mubr.f32.mxu0 0.0
      %1901 = vmatmul.mubr.f32.gmra.mxu0 %v1811
      %v1902 = vpop.f32.mrf.mxu0
      %v1903 = vadd.f32 0.0, %v1902
      %v1904 = vpop.f32.mrf.mxu0
      %1905 = vmatprep.mubr.f32.mxu0 0.0
      %1906 = vmatmul.mubr.f32.gmra.mxu0 %v1814
      %v1907 = vpop.f32.mrf.mxu0
      %v1908 = vadd.f32 0.0, %v1907
      %v1909 = vpop.f32.mrf.mxu0
      %1910 = vmatprep.mubr.f32.mxu0 0.0
      %1911 = vmatmul.mubr.f32.gmra.mxu0 %v1817
      %v1912 = vpop.f32.mrf.mxu0
      %v1913 = vadd.f32 0.0, %v1912
      %v1914 = vpop.f32.mrf.mxu0
      %1915 = vmatprep.mubr.f32.mxu0 0.0
      %1916 = vmatmul.mubr.f32.gmra.mxu0 %v1820
      %v1917 = vpop.f32.mrf.mxu0
      %v1918 = vadd.f32 0.0, %v1917
      %v1919 = vpop.f32.mrf.mxu0
      %1920 = vmatprep.mubr.f32.mxu0 0.0
      %1921 = vmatmul.mubr.f32.gmra.mxu0 %v1823
      %v1922 = vpop.f32.mrf.mxu0
      %v1923 = vadd.f32 0.0, %v1922
      %v1924 = vpop.f32.mrf.mxu0
      %1925 = vmatprep.mubr.f32.mxu0 0.0
      %1926 = vmatmul.mubr.f32.gmra.mxu0 %v1826
      %v1927 = vpop.f32.mrf.mxu0
      %v1928 = vadd.f32 0.0, %v1927
      %v1929 = vpop.f32.mrf.mxu0
      %1930 = vmatprep.mubr.f32.mxu0 0.0
      %1931 = vmatmul.mubr.f32.gmra.mxu0 %v1829
      %v1932 = vpop.f32.mrf.mxu0
      %v1933 = vadd.f32 0.0, %v1932
      %v1934 = vpop.f32.mrf.mxu0
      %1935 = vdwg.mxu0
      %v1936 = vmul.f32 %v1898, %v1760
      %v1937 = vmul.f32 %v1903, %v1762
      %v1938 = vmul.f32 %v1908, %v1764
      %v1939 = vmul.f32 %v1913, %v1766
      %v1940 = vmul.f32 %v1918, %v1768
      %v1941 = vmul.f32 %v1923, %v1770
      %v1942 = vmul.f32 %v1928, %v1772
      %v1943 = vmul.f32 %v1933, %v1774
      %1952 = vrot.lane.b32.xlu0 %v1936, 4
      %v1953 = vpop.permute.xlu0 %1952
      %1954 = vrot.lane.b32.xlu0 %v1937, 4
      %v1955 = vpop.permute.xlu0 %1954
      %1956 = vrot.lane.b32.xlu0 %v1938, 4
      %v1957 = vpop.permute.xlu0 %1956
      %1958 = vrot.lane.b32.xlu0 %v1939, 4
      %v1959 = vpop.permute.xlu0 %1958
      %1960 = vrot.lane.b32.xlu0 %v1940, 4
      %v1961 = vpop.permute.xlu0 %1960
      %1962 = vrot.lane.b32.xlu0 %v1941, 4
      %v1963 = vpop.permute.xlu0 %1962
      %1964 = vrot.lane.b32.xlu0 %v1942, 4
      %v1965 = vpop.permute.xlu0 %1964
      %1966 = vrot.lane.b32.xlu0 %v1943, 4
      %v1967 = vpop.permute.xlu0 %1966
      %v1976 = vsel %vm1138, %v1510, %v1953
      %v1977 = vsel %vm1138, %v1511, %v1955
      %v1978 = vsel %vm1138, %v1512, %v1957
      %v1979 = vsel %vm1138, %v1513, %v1959
      %v1980 = vsel %vm1138, %v1514, %v1961
      %v1981 = vsel %vm1138, %v1515, %v1963
      %v1982 = vsel %vm1138, %v1516, %v1965
      %v1983 = vsel %vm1138, %v1517, %v1967
      %v1984 = vld [vmem:[%s6] sm:$0xff]
      %v1986 = vsel %vm389, %v1976, 0
      %v1989 = vsel %vm389, %v1977, 0
      %v1992 = vsel %vm389, %v1978, 0
      %v1995 = vsel %vm389, %v1979, 0
      %v1998 = vsel %vm389, %v1980, 0
      %v2001 = vsel %vm389, %v1981, 0
      %v2004 = vsel %vm389, %v1982, 0
      %v2007 = vsel %vm389, %v1983, 0
      %v2010 = vsel %vm389, %v1984, 0
      %2012 = vmatprep.subr.mxu0 0.0
      %2013 = vmatpush1.xpose.msra.mxu0 0.0
      %2014 = vmatprep.subr.mxu0 0.0
      %2015 = vmatpush1.xpose.msra.mxu0 0.0
      %2016 = vmatprep.subr.mxu0 0.0
      %2017 = vmatpush1.xpose.msra.mxu0 0.0
      %2018 = vmatprep.subr.mxu0 0.0
      %2019 = vmatpush1.xpose.msra.mxu0 0.0
      %2020 = vmatprep.subr.mxu0 0.0
      %2021 = vmatpush1.xpose.msra.mxu0 0.0
      %2022 = vmatprep.subr.mxu0 0.0
      %2023 = vmatpush1.xpose.msra.mxu0 0.0
      %2024 = vmatprep.subr.mxu0 0.0
      %2025 = vmatpush1.xpose.msra.mxu0 0.0
      %2026 = vmatprep.subr.mxu0 0.0
      %2027 = vmatpush1.xpose.msra.mxu0 0.0
      %2028 = vmatprep.subr.mxu0 0.0
      %2029 = vmatpush1.xpose.msra.mxu0 0.0
      %2030 = vmatprep.subr.mxu0 0.0
      %2031 = vmatpush1.xpose.msra.mxu0 0.0
      %2032 = vmatprep.subr.mxu0 0.0
      %2033 = vmatpush1.xpose.msra.mxu0 0.0
      %2034 = vmatprep.subr.mxu0 0.0
      %2035 = vmatpush1.xpose.msra.mxu0 0.0
      %2036 = vmatprep.subr.mxu0 0.0
      %2037 = vmatpush1.xpose.msra.mxu0 0.0
      %2038 = vmatprep.subr.mxu0 0.0
      %2039 = vmatpush1.xpose.msra.mxu0 0.0
      %2040 = vmatprep.subr.mxu0 0.0
      %2041 = vmatpush1.xpose.msra.mxu0 0.0
      %2042 = vmatprep.subr.mxu0 0.0
      %2043 = vmatpush1.xpose.msra.mxu0 %v2010
      %2044 = vmatprep.subr.mxu0 0.0
      %2045 = vmatpush2.xpose.msra.mxu0 0.0
      %2046 = vmatprep.subr.mxu0 0.0
      %2047 = vmatpush2.xpose.msra.mxu0 0.0
      %2048 = vmatprep.subr.mxu0 0.0
      %2049 = vmatpush2.xpose.msra.mxu0 0.0
      %2050 = vmatprep.subr.mxu0 0.0
      %2051 = vmatpush2.xpose.msra.mxu0 0.0
      %2052 = vmatprep.subr.mxu0 0.0
      %2053 = vmatpush2.xpose.msra.mxu0 0.0
      %2054 = vmatprep.subr.mxu0 0.0
      %2055 = vmatpush2.xpose.msra.mxu0 0.0
      %2056 = vmatprep.subr.mxu0 0.0
      %2057 = vmatpush2.xpose.msra.mxu0 0.0
      %2058 = vmatprep.subr.mxu0 0.0
      %2059 = vmatpush2.xpose.msra.mxu0 0.0
      %2060 = vmatprep.subr.mxu0 0.0
      %2061 = vmatpush2.xpose.msra.mxu0 0.0
      %2062 = vmatprep.subr.mxu0 0.0
      %2063 = vmatpush2.xpose.msra.mxu0 0.0
      %2064 = vmatprep.subr.mxu0 0.0
      %2065 = vmatpush2.xpose.msra.mxu0 0.0
      %2066 = vmatprep.subr.mxu0 0.0
      %2067 = vmatpush2.xpose.msra.mxu0 0.0
      %2068 = vmatprep.subr.mxu0 0.0
      %2069 = vmatpush2.xpose.msra.mxu0 0.0
      %2070 = vmatprep.subr.mxu0 0.0
      %2071 = vmatpush2.xpose.msra.mxu0 0.0
      %2072 = vmatprep.subr.mxu0 0.0
      %2073 = vmatpush2.xpose.msra.mxu0 0.0
      %2074 = vmatprep.subr.mxu0 0.0
      %2075 = vmatpush2.xpose.msra.mxu0 0.0
      %2076 = vmatprep.mubr.f32.mxu0 0.0
      %2077 = vmatmul.mubr.f32.gmra.mxu0 %v1986
      %v2078 = vpop.f32.mrf.mxu0
      %v2079 = vadd.f32 0.0, %v2078
      %v2080 = vpop.f32.mrf.mxu0
      %2081 = vmatprep.mubr.f32.mxu0 0.0
      %2082 = vmatmul.mubr.f32.gmra.mxu0 %v1989
      %v2083 = vpop.f32.mrf.mxu0
      %v2084 = vadd.f32 0.0, %v2083
      %v2085 = vpop.f32.mrf.mxu0
      %2086 = vmatprep.mubr.f32.mxu0 0.0
      %2087 = vmatmul.mubr.f32.gmra.mxu0 %v1992
      %v2088 = vpop.f32.mrf.mxu0
      %v2089 = vadd.f32 0.0, %v2088
      %v2090 = vpop.f32.mrf.mxu0
      %2091 = vmatprep.mubr.f32.mxu0 0.0
      %2092 = vmatmul.mubr.f32.gmra.mxu0 %v1995
      %v2093 = vpop.f32.mrf.mxu0
      %v2094 = vadd.f32 0.0, %v2093
      %v2095 = vpop.f32.mrf.mxu0
      %2096 = vmatprep.mubr.f32.mxu0 0.0
      %2097 = vmatmul.mubr.f32.gmra.mxu0 %v1998
      %v2098 = vpop.f32.mrf.mxu0
      %v2099 = vadd.f32 0.0, %v2098
      %v2100 = vpop.f32.mrf.mxu0
      %2101 = vmatprep.mubr.f32.mxu0 0.0
      %2102 = vmatmul.mubr.f32.gmra.mxu0 %v2001
      %v2103 = vpop.f32.mrf.mxu0
      %v2104 = vadd.f32 0.0, %v2103
      %v2105 = vpop.f32.mrf.mxu0
      %2106 = vmatprep.mubr.f32.mxu0 0.0
      %2107 = vmatmul.mubr.f32.gmra.mxu0 %v2004
      %v2108 = vpop.f32.mrf.mxu0
      %v2109 = vadd.f32 0.0, %v2108
      %v2110 = vpop.f32.mrf.mxu0
      %2111 = vmatprep.mubr.f32.mxu0 0.0
      %2112 = vmatmul.mubr.f32.gmra.mxu0 %v2007
      %v2113 = vpop.f32.mrf.mxu0
      %v2114 = vadd.f32 0.0, %v2113
      %v2115 = vpop.f32.mrf.mxu0
      %2116 = vdwg.mxu0
      %2117 = vst.msk [vmem:[%s378] sm:$0xff] %vm389, %v2079
      %2118 = vst.msk [vmem:[%s378 + $0x8] sm:$0xff] %vm389, %v2084
      %2119 = vst.msk [vmem:[%s378 + $0x10] sm:$0xff] %vm389, %v2089
      %2120 = vst.msk [vmem:[%s378 + $0x18] sm:$0xff] %vm389, %v2094
      %2121 = vst.msk [vmem:[%s378 + $0x20] sm:$0xff] %vm389, %v2099
      %2122 = vst.msk [vmem:[%s378 + $0x28] sm:$0xff] %vm389, %v2104
      %2123 = vst.msk [vmem:[%s378 + $0x30] sm:$0xff] %vm389, %v2109
      %2124 = vst.msk [vmem:[%s378 + $0x38] sm:$0xff] %vm389, %v2114
      %s2125 = smul.u32 8, %s20
      %p2126 = scmp.lt.s32.totalorder %s2125, 15
      %s2127 = scalar_select %p2126, %s2125, 15
      %s2128 = smul.addr %s2127, 8
      %s2129 = scalar_lea.vmem %s9, %s2128
      // Predicated region
      $region57: #{tpu_custom_call.1} parent=55 // pred_check
        %p2130 = pneg %p242
      $region58: #{tpu_custom_call.1} parent=55 // pred_check_branch
        %2132 = sbr.rel (%p2130) target = $region60
      $region59: #{tpu_custom_call.1} parent=55 // pred_region
        %s2133 = smul.u32 8, %s20
      $region60: #{tpu_custom_call.1} parent=55 // pred_fallthru
        _
    $region56: #{tpu_custom_call.1} parent=5 // pred_fallthru
      _
    %p2134 = scmp.le.s32.totalorder 2, %s15
    // Predicated region
    $region61: #{tpu_custom_call.1} parent=5 // pred_check
      %p2135 = pneg %p2134
    $region62: #{tpu_custom_call.1} parent=5 // pred_check_branch
      %2137 = sbr.rel (%p2135) target = $region64
    $region63: #{tpu_custom_call.1} parent=5 // pred_region
      %s2138 = ssub.s32 %s15, 2
      // Predicated region
      $region65: #{tpu_custom_call.1} parent=63 // pred_check
        %p2139 = pneg %p248
      $region66: #{tpu_custom_call.1} parent=63 // pred_check_branch
        %2141 = sbr.rel (%p2139) target = $region68
      $region67: #{tpu_custom_call.1} parent=63 // pred_region
        %s2142 = smul.u32 8, %s21
        %p2143 = scmp.lt.s32.totalorder %s2142, 15
        %s2144 = scalar_select %p2143, %s2142, 15
        %s2145 = smul.addr %s2144, 8
        %s2146 = scalar_lea.vmem %s9, %s2145
      $region68: #{tpu_custom_call.1} parent=63 // pred_fallthru
        _
    $region64: #{tpu_custom_call.1} parent=5 // pred_fallthru
      _
  $region6: #{tpu_custom_call.1} parent=0 // loop_footer
    %s19 = sadd.s32 1, %s15
  $region7: #{tpu_custom_call.1} parent=0 // loop_footer_branch
    %14 = sbr.rel target = $region3
  $region8: #{tpu_custom_call.1} parent=0 // loop_exit
    _

</llo_original>
